<compile_context>
chip_gen: v7x
topology: tpu7x:2x2x1
jax: 0.10.0
libtpu: 0.0.40
codegen_flags: <defaults>
</compile_context>

<pallas_src>
import functools
import math

import jax
import jax.numpy as jnp
from jax.experimental import pallas as pl
from jax.experimental.pallas import tpu as pltpu


def _layer_norm(z, gamma, beta, eps=1e-5):
    mu = jnp.mean(z, axis=-1, keepdims=True)
    var = jnp.mean((z - mu) ** 2, axis=-1, keepdims=True)
    return (z - mu) * jax.lax.rsqrt(var + eps) * gamma + beta


def encoder_stack_kernel(x_ref,                                 # (Bt, S, H) f32
                         vl_ref,                                # (Bt, 1, 1) int32
                         wq_ref, wk_ref, wv_ref, wo_ref,        # (1, H, H) bf16
                         ln1_g_ref, ln1_b_ref,                  # (1, 1, H) f32
                         w1_ref, b1_ref,                        # (1, H, F) bf16 / (1, 1, F) f32
                         w2_ref, b2_ref,                        # (1, F, H) bf16 / (1, 1, H) f32
                         ln2_g_ref, ln2_b_ref,                  # (1, 1, H) f32
                         o_ref,                                 # (Bt, S, H) f32 — resident carry
                         *, num_heads, batch_tile, seq_len, hidden):
    layer = pl.program_id(1)
    Bt, S, H = batch_tile, seq_len, hidden
    nh = num_heads
    dh = H // nh
    scale = 1.0 / math.sqrt(dh)

    # Layer 0: seed the resident residual stream.  o_ref's block index does not
    # depend on the layer axis, so it stays in VMEM across all layers and is
    # written back to HBM exactly once per batch tile.
    @pl.when(layer == 0)
    def _():
        o_ref[...] = x_ref[...]

    x = o_ref[...].reshape(Bt * S, H)                           # residual stream, f32
    xb = x.astype(jnp.bfloat16)

    # ---- MultiHeadAttention (use_bias=False): fused bf16 projections on MXU ----
    q = jnp.dot(xb, wq_ref[0], preferred_element_type=jnp.float32)   # (Bt*S, H)
    k = jnp.dot(xb, wk_ref[0], preferred_element_type=jnp.float32)
    v = jnp.dot(xb, wv_ref[0], preferred_element_type=jnp.float32)

    # Fold 1/sqrt(dh) into q once (cheaper than scaling each (S,S) score tile).
    qb = (q * scale).astype(jnp.bfloat16)
    kb = k.astype(jnp.bfloat16)
    vb = v.astype(jnp.bfloat16)

    # masked_softmax semantics: keys at index >= valid_len get -1e6.
    # Hoisted once per layer (shared by all heads).
    key_idx = jax.lax.broadcasted_iota(jnp.int32, (1, 1, S), 2)
    key_mask = key_idx < vl_ref[...]                            # (Bt, 1, S)

    ctx_heads = []
    for h in range(nh):                                         # static head loop
        sl = slice(h * dh, (h + 1) * dh)                        # static lane slice
        qh = qb[:, sl].reshape(Bt, S, dh)
        kh = kb[:, sl].reshape(Bt, S, dh)
        vh = vb[:, sl].reshape(Bt, S, dh)

        # Whole batch tile in one batched MXU call per head.
        s_h = jnp.einsum('bqd,bkd->bqk', qh, kh,
                         preferred_element_type=jnp.float32)    # (Bt, S, S)
        s_h = jnp.where(key_mask, s_h, -1e6)

        m = jnp.max(s_h, axis=-1, keepdims=True)
        e = jnp.exp(s_h - m)
        inv_l = pl.reciprocal(jnp.sum(e, axis=-1, keepdims=True), approx=True)
        p = (e * inv_l).astype(jnp.bfloat16)                    # (Bt, S, S)

        ctx = jnp.einsum('bqk,bkd->bqd', p, vh,
                         preferred_element_type=jnp.float32)    # (Bt, S, dh)
        ctx_heads.append(ctx.astype(jnp.bfloat16).reshape(Bt * S, dh))

    attn = jnp.concatenate(ctx_heads, axis=-1) if nh > 1 else ctx_heads[0]
    attn = jnp.dot(attn, wo_ref[0], preferred_element_type=jnp.float32)

    # ---- AddNorm 1 (dropout = identity at inference) ----
    y = _layer_norm(attn + x, ln1_g_ref[0], ln1_b_ref[0])

    # ---- PositionWiseFFN (ReLU fused with bf16 downcast) ----
    h1 = jnp.dot(y.astype(jnp.bfloat16), w1_ref[0],
                 preferred_element_type=jnp.float32) + b1_ref[0]
    h1 = jnp.maximum(h1, 0.0).astype(jnp.bfloat16)
    ffn = jnp.dot(h1, w2_ref[0], preferred_element_type=jnp.float32) + b2_ref[0]

    # ---- AddNorm 2 ----
    out = _layer_norm(ffn + y, ln2_g_ref[0], ln2_b_ref[0])
    o_ref[...] = out.reshape(Bt, S, H)                          # carry to next layer


def _vmem_limit_bytes():
    # v7x has 64 MiB VMEM per TensorCore; v5e/v6e have 128 MiB.  Request ~80%
    # of physical (capped) so the compiler keeps headroom for internal scratch
    # and pipeline buffers on every generation.
    default = 128 * 1024 * 1024
    try:
        cap = getattr(pltpu.get_tpu_info(), "vmem_capacity_bytes", default)
    except Exception:
        cap = default
    if not cap:
        cap = default
    return int(min(cap * 0.8, 100 * 1024 * 1024))


def encoder_stack(x, valid_lens, p, num_heads, batch_tile=None):
    B, S, H = x.shape
    L = p["wq"].shape[0]
    F = p["w1"].shape[2]
    assert H % num_heads == 0

    if batch_tile is None:
        # >= 2 batch tiles lets the "parallel" axis shard across v7x's two
        # TensorCores; on single-core chips the extra grid step is cheap.
        batch_tile = B // 2 if (B % 2 == 0 and B >= 2) else B
    Bt = batch_tile
    assert B % Bt == 0
    nb = B // Bt

    vl3 = valid_lens.astype(jnp.int32).reshape(B, 1, 1)

    def wspec(shape):
        zeros = (0,) * len(shape)
        return pl.BlockSpec((1,) + shape, lambda i, l, _z=zeros: (l,) + _z)

    grid_spec = pltpu.PrefetchScalarGridSpec(
        num_scalar_prefetch=0,
        grid=(nb, L),                                  # (batch tiles, layers)
        in_specs=[
            pl.BlockSpec((Bt, S, H), lambda i, l: (i, 0, 0)),
            pl.BlockSpec((Bt, 1, 1), lambda i, l: (i, 0, 0)),
            wspec((H, H)), wspec((H, H)), wspec((H, H)), wspec((H, H)),
            wspec((1, H)), wspec((1, H)),
            wspec((H, F)), wspec((1, F)),
            wspec((F, H)), wspec((1, H)),
            wspec((1, H)), wspec((1, H)),
        ],
        out_specs=pl.BlockSpec((Bt, S, H), lambda i, l: (i, 0, 0)),
    )

    kern = functools.partial(encoder_stack_kernel, num_heads=num_heads,
                             batch_tile=Bt, seq_len=S, hidden=H)

    # Advisory cost estimate so XLA schedules surrounding ops sensibly.
    flops = 2 * L * B * S * (4 * H * H + 2 * S * H + 2 * H * F)
    transcendentals = L * B * num_heads * S * S + 2 * L * B * S
    weight_bytes = 2 * (4 * H * H + 2 * H * F) + 4 * (5 * H + F)
    bytes_accessed = 2 * B * S * H * 4 + L * nb * weight_bytes

    return pl.pallas_call(
        kern,
        out_shape=jax.ShapeDtypeStruct((B, S, H), jnp.float32),
        grid_spec=grid_spec,
        compiler_params=pltpu.CompilerParams(
            dimension_semantics=("parallel", "arbitrary"),
            vmem_limit_bytes=_vmem_limit_bytes(),
        ),
        cost_estimate=pl.CostEstimate(
            flops=flops, transcendentals=transcendentals,
            bytes_accessed=bytes_accessed),
    )(x, vl3,
      p["wq"], p["wk"], p["wv"], p["wo"],
      p["ln1_g"], p["ln1_b"],
      p["w1"], p["b1"], p["w2"], p["b2"],
      p["ln2_g"], p["ln2_b"])


def make_pos_encoding(max_len, H):
    pos = jnp.arange(max_len, dtype=jnp.float32)[:, None]
    div = jnp.power(10000.0, jnp.arange(0, H, 2, dtype=jnp.float32) / H)
    ang = pos / div                                    # (max_len, H//2)
    P = jnp.zeros((max_len, H), jnp.float32)
    P = P.at[:, 0::2].set(jnp.sin(ang))
    P = P.at[:, 1::2].set(jnp.cos(ang))
    return P


def init_params(key, vocab_size, H, F, num_layers):
    ks = jax.random.split(key, 7)

    def w(k, shape):   # matmul weights stored in bf16 (MXU-native dtype)
        return (jax.random.normal(k, shape, jnp.float32) * 0.02).astype(jnp.bfloat16)

    return {
        "emb": jax.random.normal(ks[0], (vocab_size, H), jnp.float32) * 0.02,
        # Per-layer weights stacked along a leading layer axis.
        "wq": w(ks[1], (num_layers, H, H)),
        "wk": w(ks[2], (num_layers, H, H)),
        "wv": w(ks[3], (num_layers, H, H)),
        "wo": w(ks[4], (num_layers, H, H)),
        "ln1_g": jnp.ones((num_layers, 1, H), jnp.float32),
        "ln1_b": jnp.zeros((num_layers, 1, H), jnp.float32),
        "w1": w(ks[5], (num_layers, H, F)),
        "b1": jnp.zeros((num_layers, 1, F), jnp.float32),
        "w2": w(ks[6], (num_layers, F, H)),
        "b2": jnp.zeros((num_layers, 1, H), jnp.float32),
        "ln2_g": jnp.ones((num_layers, 1, H), jnp.float32),
        "ln2_b": jnp.zeros((num_layers, 1, H), jnp.float32),
    }


def transformer_encoder(params, X_tokens, valid_lens, num_heads, pos_P,
                        batch_tile=None):
    B, S = X_tokens.shape
    H = params["emb"].shape[1]
    # Embedding * sqrt(H) + positional encoding (dropout = identity) — JAX glue.
    x = params["emb"][X_tokens] * math.sqrt(H) + pos_P[None, :S, :]
    return encoder_stack(x.astype(jnp.float32), valid_lens, params, num_heads,
                         batch_tile)


if __name__ == "__main__":
    VOCAB, B, S, H, F, HEADS, LAYERS = 20, 2, 8, 32, 64, 4, 2

    key = jax.random.PRNGKey(0)
    k_param, k_tok = jax.random.split(key)
    params = init_params(k_param, VOCAB, H, F, LAYERS)
    pos_P = make_pos_encoding(1000, H)

    X_tokens = jax.random.randint(k_tok, (B, S), 0, VOCAB, dtype=jnp.int32)
    valid_lens = jnp.array([8, 5], dtype=jnp.int32)

    out = transformer_encoder(params, X_tokens, valid_lens, HEADS, pos_P)
    out = jax.block_until_ready(out)
    assert out.shape == (B, S, H) and out.dtype == jnp.float32
    assert bool(jnp.all(jnp.isfinite(out)))
    print("KERNEL_OK")
</pallas_src>

<mosaic_0001>
module attributes {stable_mosaic.version = 11 : i64} {
  func.func @encoder_stack_kernel(%arg0: i32, %arg1: i32, %arg2: memref<1x8x32xf32, #tpu.memory_space<vmem>>, %arg3: memref<1x1x1xi32, #tpu.memory_space<vmem>>, %arg4: memref<1x32x32xbf16, #tpu.memory_space<vmem>>, %arg5: memref<1x32x32xbf16, #tpu.memory_space<vmem>>, %arg6: memref<1x32x32xbf16, #tpu.memory_space<vmem>>, %arg7: memref<1x32x32xbf16, #tpu.memory_space<vmem>>, %arg8: memref<1x1x32xf32, #tpu.memory_space<vmem>>, %arg9: memref<1x1x32xf32, #tpu.memory_space<vmem>>, %arg10: memref<1x32x64xbf16, #tpu.memory_space<vmem>>, %arg11: memref<1x1x64xf32, #tpu.memory_space<vmem>>, %arg12: memref<1x64x32xbf16, #tpu.memory_space<vmem>>, %arg13: memref<1x1x32xf32, #tpu.memory_space<vmem>>, %arg14: memref<1x1x32xf32, #tpu.memory_space<vmem>>, %arg15: memref<1x1x32xf32, #tpu.memory_space<vmem>>, %arg16: memref<1x8x32xf32, #tpu.memory_space<vmem>>) attributes {dimension_semantics = [#tpu.dimension_semantics<parallel>, #tpu.dimension_semantics<arbitrary>], iteration_bounds = array<i64: 2, 2>, scalar_prefetch = 0 : i64, scratch_operands = 0 : i64, tpu.core_type = #tpu.core_type<tc>, window_params = [{transform_indices = @transform_0, window_bounds = array<i64: 1, 8, 32>}, {transform_indices = @transform_1, window_bounds = array<i64: 1, 1, 1>}, {transform_indices = @transform_2, window_bounds = array<i64: 1, 32, 32>}, {transform_indices = @transform_3, window_bounds = array<i64: 1, 32, 32>}, {transform_indices = @transform_4, window_bounds = array<i64: 1, 32, 32>}, {transform_indices = @transform_5, window_bounds = array<i64: 1, 32, 32>}, {transform_indices = @transform_6, window_bounds = array<i64: 1, 1, 32>}, {transform_indices = @transform_7, window_bounds = array<i64: 1, 1, 32>}, {transform_indices = @transform_8, window_bounds = array<i64: 1, 32, 64>}, {transform_indices = @transform_9, window_bounds = array<i64: 1, 1, 64>}, {transform_indices = @transform_10, window_bounds = array<i64: 1, 64, 32>}, {transform_indices = @transform_11, window_bounds = array<i64: 1, 1, 32>}, {transform_indices = @transform_12, window_bounds = array<i64: 1, 1, 32>}, {transform_indices = @transform_13, window_bounds = array<i64: 1, 1, 32>}, {transform_indices = @transform_14, window_bounds = array<i64: 1, 8, 32>}]} {
    %c0_i32 = arith.constant 0 : i32
    %0 = arith.cmpi eq, %arg1, %c0_i32 : i32
    %1 = arith.extui %0 : i1 to i32
    %c0_i32_0 = arith.constant 0 : i32
    %2 = arith.cmpi ne, %1, %c0_i32_0 : i32
    scf.if %2 {
      %c0_82 = arith.constant 0 : index
      %c0_83 = arith.constant 0 : index
      %c0_84 = arith.constant 0 : index
      %202 = vector.load %arg2[%c0_82, %c0_83, %c0_84] : memref<1x8x32xf32, #tpu.memory_space<vmem>>, vector<1x8x32xf32>
      %c0_85 = arith.constant 0 : index
      %c0_86 = arith.constant 0 : index
      %c0_87 = arith.constant 0 : index
      %203 = vector.load %arg16[%c0_85, %c0_86, %c0_87] : memref<1x8x32xf32, #tpu.memory_space<vmem>>, vector<1x8x32xf32>
      tpu.vector_store %arg16[%c0_85, %c0_86, %c0_87], %202 {strides = array<i32>} : memref<1x8x32xf32, #tpu.memory_space<vmem>>, vector<1x8x32xf32>,
    } else {
    }
    %c0 = arith.constant 0 : index
    %c0_1 = arith.constant 0 : index
    %c0_2 = arith.constant 0 : index
    %3 = vector.load %arg16[%c0, %c0_1, %c0_2] : memref<1x8x32xf32, #tpu.memory_space<vmem>>, vector<1x8x32xf32>
    %4 = vector.shape_cast %3 : vector<1x8x32xf32> to vector<8x32xf32>
    %5 = arith.truncf %4 : vector<8x32xf32> to vector<8x32xbf16>
    %c0_3 = arith.constant 0 : index
    %c0_4 = arith.constant 0 : index
    %c0_5 = arith.constant 0 : index
    %6 = vector.load %arg4[%c0_3, %c0_4, %c0_5] : memref<1x32x32xbf16, #tpu.memory_space<vmem>>, vector<1x32x32xbf16>
    %7 = vector.shape_cast %6 : vector<1x32x32xbf16> to vector<32x32xbf16>
    %cst = arith.constant dense<0.000000e+00> : vector<8x32xf32>
    %8 = tpu.matmul %5, %7, %cst {dimension_numbers = #tpu.dot_dimension_numbers<[1], [0], [0], [1], [0, 0, 1, 1], [], []>} : vector<8x32xbf16>, vector<32x32xbf16>, vector<8x32xf32> -> vector<8x32xf32>
    %c0_6 = arith.constant 0 : index
    %c0_7 = arith.constant 0 : index
    %c0_8 = arith.constant 0 : index
    %9 = vector.load %arg5[%c0_6, %c0_7, %c0_8] : memref<1x32x32xbf16, #tpu.memory_space<vmem>>, vector<1x32x32xbf16>
    %10 = vector.shape_cast %9 : vector<1x32x32xbf16> to vector<32x32xbf16>
    %cst_9 = arith.constant dense<0.000000e+00> : vector<8x32xf32>
    %11 = tpu.matmul %5, %10, %cst_9 {dimension_numbers = #tpu.dot_dimension_numbers<[1], [0], [0], [1], [0, 0, 1, 1], [], []>} : vector<8x32xbf16>, vector<32x32xbf16>, vector<8x32xf32> -> vector<8x32xf32>
    %c0_10 = arith.constant 0 : index
    %c0_11 = arith.constant 0 : index
    %c0_12 = arith.constant 0 : index
    %12 = vector.load %arg6[%c0_10, %c0_11, %c0_12] : memref<1x32x32xbf16, #tpu.memory_space<vmem>>, vector<1x32x32xbf16>
    %13 = vector.shape_cast %12 : vector<1x32x32xbf16> to vector<32x32xbf16>
    %cst_13 = arith.constant dense<0.000000e+00> : vector<8x32xf32>
    %14 = tpu.matmul %5, %13, %cst_13 {dimension_numbers = #tpu.dot_dimension_numbers<[1], [0], [0], [1], [0, 0, 1, 1], [], []>} : vector<8x32xbf16>, vector<32x32xbf16>, vector<8x32xf32> -> vector<8x32xf32>
    %cst_14 = arith.constant 0.353553385 : f32
    %15 = vector.broadcast %cst_14 : f32 to vector<8x32xf32>
    %16 = arith.mulf %8, %15 : vector<8x32xf32>
    %17 = arith.truncf %16 : vector<8x32xf32> to vector<8x32xbf16>
    %18 = arith.truncf %11 : vector<8x32xf32> to vector<8x32xbf16>
    %19 = arith.truncf %14 : vector<8x32xf32> to vector<8x32xbf16>
    %20 = tpu.iota {dimensions = array<i32: 2>} : vector<1x1x8xi32>
    %c0_15 = arith.constant 0 : index
    %c0_16 = arith.constant 0 : index
    %c0_17 = arith.constant 0 : index
    %21 = vector.load %arg3[%c0_15, %c0_16, %c0_17] : memref<1x1x1xi32, #tpu.memory_space<vmem>>, vector<1x1x1xi32>
    %22 = vector.broadcast %21 : vector<1x1x1xi32> to vector<1x1x8xi32>
    %23 = arith.cmpi slt, %20, %22 : vector<1x1x8xi32>
    %24 = vector.extract_strided_slice %17 {offsets = [0, 0], sizes = [8, 8], strides = [1, 1]} : vector<8x32xbf16> to vector<8x8xbf16>
    %25 = vector.shape_cast %24 : vector<8x8xbf16> to vector<1x8x8xbf16>
    %26 = vector.extract_strided_slice %18 {offsets = [0, 0], sizes = [8, 8], strides = [1, 1]} : vector<8x32xbf16> to vector<8x8xbf16>
    %27 = vector.shape_cast %26 : vector<8x8xbf16> to vector<1x8x8xbf16>
    %28 = vector.extract_strided_slice %19 {offsets = [0, 0], sizes = [8, 8], strides = [1, 1]} : vector<8x32xbf16> to vector<8x8xbf16>
    %29 = vector.shape_cast %28 : vector<8x8xbf16> to vector<1x8x8xbf16>
    "tpu.trace_start"() <{level = 10 : i32, message = "bqd,bkd->bqk"}> : () -> ()
    %cst_18 = arith.constant dense<0.000000e+00> : vector<1x8x8xf32>
    %30 = tpu.matmul %25, %27, %cst_18 {dimension_numbers = #tpu.dot_dimension_numbers<[2], [2], [1], [1], [0, 0, 0, 1, 1, 1], [0], [0]>} : vector<1x8x8xbf16>, vector<1x8x8xbf16>, vector<1x8x8xf32> -> vector<1x8x8xf32>
    %cst_19 = arith.constant -1.000000e+06 : f32
    "tpu.trace_stop"() : () -> ()
    %31 = vector.shape_cast %23 : vector<1x1x8xi1> to vector<1x1x8xi1>
    %32 = vector.broadcast %31 : vector<1x1x8xi1> to vector<1x8x8xi1>
    %33 = vector.broadcast %cst_19 : f32 to vector<1x8x8xf32>
    %34 = arith.select %32, %30, %33 : vector<1x8x8xi1>, vector<1x8x8xf32>
    %cst_20 = arith.constant dense<0xFF800000> : vector<1x8xf32>
    %35 = vector.multi_reduction <maximumf>, %34, %cst_20 [2] : vector<1x8x8xf32> to vector<1x8xf32>
    %36 = vector.shape_cast %35 : vector<1x8xf32> to vector<1x8x1xf32>
    %37 = vector.broadcast %36 : vector<1x8x1xf32> to vector<1x8x8xf32>
    %38 = arith.subf %34, %37 : vector<1x8x8xf32>
    %39 = math.exp %38 : vector<1x8x8xf32>
    %cst_21 = arith.constant dense<0.000000e+00> : vector<1x8xf32>
    %40 = vector.multi_reduction <add>, %39, %cst_21 [2] : vector<1x8x8xf32> to vector<1x8xf32>
    %41 = vector.shape_cast %40 : vector<1x8xf32> to vector<1x8x1xf32>
    %42 = tpu.reciprocal %41 {approx = true} : vector<1x8x1xf32> -> vector<1x8x1xf32>
    %43 = vector.broadcast %42 : vector<1x8x1xf32> to vector<1x8x8xf32>
    %44 = arith.mulf %39, %43 : vector<1x8x8xf32>
    %45 = arith.truncf %44 : vector<1x8x8xf32> to vector<1x8x8xbf16>
    "tpu.trace_start"() <{level = 10 : i32, message = "bqk,bkd->bqd"}> : () -> ()
    %cst_22 = arith.constant dense<0.000000e+00> : vector<1x8x8xf32>
    %46 = tpu.matmul %45, %29, %cst_22 {dimension_numbers = #tpu.dot_dimension_numbers<[2], [1], [1], [2], [0, 0, 0, 1, 1, 2], [0], [0]>} : vector<1x8x8xbf16>, vector<1x8x8xbf16>, vector<1x8x8xf32> -> vector<1x8x8xf32>
    "tpu.trace_stop"() : () -> ()
    %47 = arith.truncf %46 : vector<1x8x8xf32> to vector<1x8x8xbf16>
    %48 = vector.shape_cast %47 : vector<1x8x8xbf16> to vector<8x8xbf16>
    %49 = vector.extract_strided_slice %17 {offsets = [0, 8], sizes = [8, 8], strides = [1, 1]} : vector<8x32xbf16> to vector<8x8xbf16>
    %50 = vector.shape_cast %49 : vector<8x8xbf16> to vector<1x8x8xbf16>
    %51 = vector.extract_strided_slice %18 {offsets = [0, 8], sizes = [8, 8], strides = [1, 1]} : vector<8x32xbf16> to vector<8x8xbf16>
    %52 = vector.shape_cast %51 : vector<8x8xbf16> to vector<1x8x8xbf16>
    %53 = vector.extract_strided_slice %19 {offsets = [0, 8], sizes = [8, 8], strides = [1, 1]} : vector<8x32xbf16> to vector<8x8xbf16>
    %54 = vector.shape_cast %53 : vector<8x8xbf16> to vector<1x8x8xbf16>
    "tpu.trace_start"() <{level = 10 : i32, message = "bqd,bkd->bqk"}> : () -> ()
    %cst_23 = arith.constant dense<0.000000e+00> : vector<1x8x8xf32>
    %55 = tpu.matmul %50, %52, %cst_23 {dimension_numbers = #tpu.dot_dimension_numbers<[2], [2], [1], [1], [0, 0, 0, 1, 1, 1], [0], [0]>} : vector<1x8x8xbf16>, vector<1x8x8xbf16>, vector<1x8x8xf32> -> vector<1x8x8xf32>
    %cst_24 = arith.constant -1.000000e+06 : f32
    "tpu.trace_stop"() : () -> ()
    %56 = vector.shape_cast %23 : vector<1x1x8xi1> to vector<1x1x8xi1>
    %57 = vector.broadcast %56 : vector<1x1x8xi1> to vector<1x8x8xi1>
    %58 = vector.broadcast %cst_24 : f32 to vector<1x8x8xf32>
    %59 = arith.select %57, %55, %58 : vector<1x8x8xi1>, vector<1x8x8xf32>
    %cst_25 = arith.constant dense<0xFF800000> : vector<1x8xf32>
    %60 = vector.multi_reduction <maximumf>, %59, %cst_25 [2] : vector<1x8x8xf32> to vector<1x8xf32>
    %61 = vector.shape_cast %60 : vector<1x8xf32> to vector<1x8x1xf32>
    %62 = vector.broadcast %61 : vector<1x8x1xf32> to vector<1x8x8xf32>
    %63 = arith.subf %59, %62 : vector<1x8x8xf32>
    %64 = math.exp %63 : vector<1x8x8xf32>
    %cst_26 = arith.constant dense<0.000000e+00> : vector<1x8xf32>
    %65 = vector.multi_reduction <add>, %64, %cst_26 [2] : vector<1x8x8xf32> to vector<1x8xf32>
    %66 = vector.shape_cast %65 : vector<1x8xf32> to vector<1x8x1xf32>
    %67 = tpu.reciprocal %66 {approx = true} : vector<1x8x1xf32> -> vector<1x8x1xf32>
    %68 = vector.broadcast %67 : vector<1x8x1xf32> to vector<1x8x8xf32>
    %69 = arith.mulf %64, %68 : vector<1x8x8xf32>
    %70 = arith.truncf %69 : vector<1x8x8xf32> to vector<1x8x8xbf16>
    "tpu.trace_start"() <{level = 10 : i32, message = "bqk,bkd->bqd"}> : () -> ()
    %cst_27 = arith.constant dense<0.000000e+00> : vector<1x8x8xf32>
    %71 = tpu.matmul %70, %54, %cst_27 {dimension_numbers = #tpu.dot_dimension_numbers<[2], [1], [1], [2], [0, 0, 0, 1, 1, 2], [0], [0]>} : vector<1x8x8xbf16>, vector<1x8x8xbf16>, vector<1x8x8xf32> -> vector<1x8x8xf32>
    "tpu.trace_stop"() : () -> ()
    %72 = arith.truncf %71 : vector<1x8x8xf32> to vector<1x8x8xbf16>
    %73 = vector.shape_cast %72 : vector<1x8x8xbf16> to vector<8x8xbf16>
    %74 = vector.extract_strided_slice %17 {offsets = [0, 16], sizes = [8, 8], strides = [1, 1]} : vector<8x32xbf16> to vector<8x8xbf16>
    %75 = vector.shape_cast %74 : vector<8x8xbf16> to vector<1x8x8xbf16>
    %76 = vector.extract_strided_slice %18 {offsets = [0, 16], sizes = [8, 8], strides = [1, 1]} : vector<8x32xbf16> to vector<8x8xbf16>
    %77 = vector.shape_cast %76 : vector<8x8xbf16> to vector<1x8x8xbf16>
    %78 = vector.extract_strided_slice %19 {offsets = [0, 16], sizes = [8, 8], strides = [1, 1]} : vector<8x32xbf16> to vector<8x8xbf16>
    %79 = vector.shape_cast %78 : vector<8x8xbf16> to vector<1x8x8xbf16>
    "tpu.trace_start"() <{level = 10 : i32, message = "bqd,bkd->bqk"}> : () -> ()
    %cst_28 = arith.constant dense<0.000000e+00> : vector<1x8x8xf32>
    %80 = tpu.matmul %75, %77, %cst_28 {dimension_numbers = #tpu.dot_dimension_numbers<[2], [2], [1], [1], [0, 0, 0, 1, 1, 1], [0], [0]>} : vector<1x8x8xbf16>, vector<1x8x8xbf16>, vector<1x8x8xf32> -> vector<1x8x8xf32>
    %cst_29 = arith.constant -1.000000e+06 : f32
    "tpu.trace_stop"() : () -> ()
    %81 = vector.shape_cast %23 : vector<1x1x8xi1> to vector<1x1x8xi1>
    %82 = vector.broadcast %81 : vector<1x1x8xi1> to vector<1x8x8xi1>
    %83 = vector.broadcast %cst_29 : f32 to vector<1x8x8xf32>
    %84 = arith.select %82, %80, %83 : vector<1x8x8xi1>, vector<1x8x8xf32>
    %cst_30 = arith.constant dense<0xFF800000> : vector<1x8xf32>
    %85 = vector.multi_reduction <maximumf>, %84, %cst_30 [2] : vector<1x8x8xf32> to vector<1x8xf32>
    %86 = vector.shape_cast %85 : vector<1x8xf32> to vector<1x8x1xf32>
    %87 = vector.broadcast %86 : vector<1x8x1xf32> to vector<1x8x8xf32>
    %88 = arith.subf %84, %87 : vector<1x8x8xf32>
    %89 = math.exp %88 : vector<1x8x8xf32>
    %cst_31 = arith.constant dense<0.000000e+00> : vector<1x8xf32>
    %90 = vector.multi_reduction <add>, %89, %cst_31 [2] : vector<1x8x8xf32> to vector<1x8xf32>
    %91 = vector.shape_cast %90 : vector<1x8xf32> to vector<1x8x1xf32>
    %92 = tpu.reciprocal %91 {approx = true} : vector<1x8x1xf32> -> vector<1x8x1xf32>
    %93 = vector.broadcast %92 : vector<1x8x1xf32> to vector<1x8x8xf32>
    %94 = arith.mulf %89, %93 : vector<1x8x8xf32>
    %95 = arith.truncf %94 : vector<1x8x8xf32> to vector<1x8x8xbf16>
    "tpu.trace_start"() <{level = 10 : i32, message = "bqk,bkd->bqd"}> : () -> ()
    %cst_32 = arith.constant dense<0.000000e+00> : vector<1x8x8xf32>
    %96 = tpu.matmul %95, %79, %cst_32 {dimension_numbers = #tpu.dot_dimension_numbers<[2], [1], [1], [2], [0, 0, 0, 1, 1, 2], [0], [0]>} : vector<1x8x8xbf16>, vector<1x8x8xbf16>, vector<1x8x8xf32> -> vector<1x8x8xf32>
    "tpu.trace_stop"() : () -> ()
    %97 = arith.truncf %96 : vector<1x8x8xf32> to vector<1x8x8xbf16>
    %98 = vector.shape_cast %97 : vector<1x8x8xbf16> to vector<8x8xbf16>
    %99 = vector.extract_strided_slice %17 {offsets = [0, 24], sizes = [8, 8], strides = [1, 1]} : vector<8x32xbf16> to vector<8x8xbf16>
    %100 = vector.shape_cast %99 : vector<8x8xbf16> to vector<1x8x8xbf16>
    %101 = vector.extract_strided_slice %18 {offsets = [0, 24], sizes = [8, 8], strides = [1, 1]} : vector<8x32xbf16> to vector<8x8xbf16>
    %102 = vector.shape_cast %101 : vector<8x8xbf16> to vector<1x8x8xbf16>
    %103 = vector.extract_strided_slice %19 {offsets = [0, 24], sizes = [8, 8], strides = [1, 1]} : vector<8x32xbf16> to vector<8x8xbf16>
    %104 = vector.shape_cast %103 : vector<8x8xbf16> to vector<1x8x8xbf16>
    "tpu.trace_start"() <{level = 10 : i32, message = "bqd,bkd->bqk"}> : () -> ()
    %cst_33 = arith.constant dense<0.000000e+00> : vector<1x8x8xf32>
    %105 = tpu.matmul %100, %102, %cst_33 {dimension_numbers = #tpu.dot_dimension_numbers<[2], [2], [1], [1], [0, 0, 0, 1, 1, 1], [0], [0]>} : vector<1x8x8xbf16>, vector<1x8x8xbf16>, vector<1x8x8xf32> -> vector<1x8x8xf32>
    %cst_34 = arith.constant -1.000000e+06 : f32
    "tpu.trace_stop"() : () -> ()
    %106 = vector.shape_cast %23 : vector<1x1x8xi1> to vector<1x1x8xi1>
    %107 = vector.broadcast %106 : vector<1x1x8xi1> to vector<1x8x8xi1>
    %108 = vector.broadcast %cst_34 : f32 to vector<1x8x8xf32>
    %109 = arith.select %107, %105, %108 : vector<1x8x8xi1>, vector<1x8x8xf32>
    %cst_35 = arith.constant dense<0xFF800000> : vector<1x8xf32>
    %110 = vector.multi_reduction <maximumf>, %109, %cst_35 [2] : vector<1x8x8xf32> to vector<1x8xf32>
    %111 = vector.shape_cast %110 : vector<1x8xf32> to vector<1x8x1xf32>
    %112 = vector.broadcast %111 : vector<1x8x1xf32> to vector<1x8x8xf32>
    %113 = arith.subf %109, %112 : vector<1x8x8xf32>
    %114 = math.exp %113 : vector<1x8x8xf32>
    %cst_36 = arith.constant dense<0.000000e+00> : vector<1x8xf32>
    %115 = vector.multi_reduction <add>, %114, %cst_36 [2] : vector<1x8x8xf32> to vector<1x8xf32>
    %116 = vector.shape_cast %115 : vector<1x8xf32> to vector<1x8x1xf32>
    %117 = tpu.reciprocal %116 {approx = true} : vector<1x8x1xf32> -> vector<1x8x1xf32>
    %118 = vector.broadcast %117 : vector<1x8x1xf32> to vector<1x8x8xf32>
    %119 = arith.mulf %114, %118 : vector<1x8x8xf32>
    %120 = arith.truncf %119 : vector<1x8x8xf32> to vector<1x8x8xbf16>
    "tpu.trace_start"() <{level = 10 : i32, message = "bqk,bkd->bqd"}> : () -> ()
    %cst_37 = arith.constant dense<0.000000e+00> : vector<1x8x8xf32>
    %121 = tpu.matmul %120, %104, %cst_37 {dimension_numbers = #tpu.dot_dimension_numbers<[2], [1], [1], [2], [0, 0, 0, 1, 1, 2], [0], [0]>} : vector<1x8x8xbf16>, vector<1x8x8xbf16>, vector<1x8x8xf32> -> vector<1x8x8xf32>
    "tpu.trace_stop"() : () -> ()
    %122 = arith.truncf %121 : vector<1x8x8xf32> to vector<1x8x8xbf16>
    %123 = vector.shape_cast %122 : vector<1x8x8xbf16> to vector<8x8xbf16>
    %124 = tpu.concatenate %48, %73, %98, %123 in 1 : vector<8x8xbf16>, vector<8x8xbf16>, vector<8x8xbf16>, vector<8x8xbf16> -> vector<8x32xbf16>
    %c0_38 = arith.constant 0 : index
    %c0_39 = arith.constant 0 : index
    %c0_40 = arith.constant 0 : index
    %125 = vector.load %arg7[%c0_38, %c0_39, %c0_40] : memref<1x32x32xbf16, #tpu.memory_space<vmem>>, vector<1x32x32xbf16>
    %126 = vector.shape_cast %125 : vector<1x32x32xbf16> to vector<32x32xbf16>
    %cst_41 = arith.constant dense<0.000000e+00> : vector<8x32xf32>
    %127 = tpu.matmul %124, %126, %cst_41 {dimension_numbers = #tpu.dot_dimension_numbers<[1], [0], [0], [1], [0, 0, 1, 1], [], []>} : vector<8x32xbf16>, vector<32x32xbf16>, vector<8x32xf32> -> vector<8x32xf32>
    %128 = arith.addf %127, %4 : vector<8x32xf32>
    %c0_42 = arith.constant 0 : index
    %c0_43 = arith.constant 0 : index
    %c0_44 = arith.constant 0 : index
    %129 = vector.load %arg8[%c0_42, %c0_43, %c0_44] : memref<1x1x32xf32, #tpu.memory_space<vmem>>, vector<1x1x32xf32>
    %130 = vector.shape_cast %129 : vector<1x1x32xf32> to vector<1x32xf32>
    %c0_45 = arith.constant 0 : index
    %c0_46 = arith.constant 0 : index
    %c0_47 = arith.constant 0 : index
    %131 = vector.load %arg9[%c0_45, %c0_46, %c0_47] : memref<1x1x32xf32, #tpu.memory_space<vmem>>, vector<1x1x32xf32>
    %132 = vector.shape_cast %131 : vector<1x1x32xf32> to vector<1x32xf32>
    %cst_48 = arith.constant dense<0.000000e+00> : vector<8xf32>
    %133 = vector.multi_reduction <add>, %128, %cst_48 [1] : vector<8x32xf32> to vector<8xf32>
    %134 = vector.shape_cast %133 : vector<8xf32> to vector<8x1xf32>
    %cst_49 = arith.constant 3.200000e+01 : f32
    %135 = vector.broadcast %cst_49 : f32 to vector<8x1xf32>
    %136 = arith.divf %134, %135 : vector<8x1xf32>
    %137 = vector.broadcast %136 : vector<8x1xf32> to vector<8x32xf32>
    %138 = arith.subf %128, %137 : vector<8x32xf32>
    %139 = arith.mulf %138, %138 : vector<8x32xf32>
    %cst_50 = arith.constant dense<0.000000e+00> : vector<8xf32>
    %140 = vector.multi_reduction <add>, %139, %cst_50 [1] : vector<8x32xf32> to vector<8xf32>
    %141 = vector.shape_cast %140 : vector<8xf32> to vector<8x1xf32>
    %cst_51 = arith.constant 3.200000e+01 : f32
    %142 = vector.broadcast %cst_51 : f32 to vector<8x1xf32>
    %143 = arith.divf %141, %142 : vector<8x1xf32>
    %144 = vector.broadcast %136 : vector<8x1xf32> to vector<8x32xf32>
    %145 = arith.subf %128, %144 : vector<8x32xf32>
    %cst_52 = arith.constant 9.99999974E-6 : f32
    %146 = vector.broadcast %cst_52 : f32 to vector<8x1xf32>
    %147 = arith.addf %143, %146 : vector<8x1xf32>
    %148 = math.rsqrt %147 : vector<8x1xf32>
    %149 = vector.broadcast %148 : vector<8x1xf32> to vector<8x32xf32>
    %150 = arith.mulf %145, %149 : vector<8x32xf32>
    %151 = vector.broadcast %130 : vector<1x32xf32> to vector<8x32xf32>
    %152 = arith.mulf %150, %151 : vector<8x32xf32>
    %153 = vector.broadcast %132 : vector<1x32xf32> to vector<8x32xf32>
    %154 = arith.addf %152, %153 : vector<8x32xf32>
    %155 = arith.truncf %154 : vector<8x32xf32> to vector<8x32xbf16>
    %c0_53 = arith.constant 0 : index
    %c0_54 = arith.constant 0 : index
    %c0_55 = arith.constant 0 : index
    %156 = vector.load %arg10[%c0_53, %c0_54, %c0_55] : memref<1x32x64xbf16, #tpu.memory_space<vmem>>, vector<1x32x64xbf16>
    %157 = vector.shape_cast %156 : vector<1x32x64xbf16> to vector<32x64xbf16>
    %cst_56 = arith.constant dense<0.000000e+00> : vector<8x64xf32>
    %158 = tpu.matmul %155, %157, %cst_56 {dimension_numbers = #tpu.dot_dimension_numbers<[1], [0], [0], [1], [0, 0, 1, 1], [], []>} : vector<8x32xbf16>, vector<32x64xbf16>, vector<8x64xf32> -> vector<8x64xf32>
    %c0_57 = arith.constant 0 : index
    %c0_58 = arith.constant 0 : index
    %c0_59 = arith.constant 0 : index
    %159 = vector.load %arg11[%c0_57, %c0_58, %c0_59] : memref<1x1x64xf32, #tpu.memory_space<vmem>>, vector<1x1x64xf32>
    %160 = vector.shape_cast %159 : vector<1x1x64xf32> to vector<1x64xf32>
    %161 = vector.broadcast %160 : vector<1x64xf32> to vector<8x64xf32>
    %162 = arith.addf %158, %161 : vector<8x64xf32>
    %cst_60 = arith.constant 0.000000e+00 : f32
    %163 = vector.broadcast %cst_60 : f32 to vector<8x64xf32>
    %164 = arith.maximumf %162, %163 : vector<8x64xf32>
    %165 = arith.truncf %164 : vector<8x64xf32> to vector<8x64xbf16>
    %c0_61 = arith.constant 0 : index
    %c0_62 = arith.constant 0 : index
    %c0_63 = arith.constant 0 : index
    %166 = vector.load %arg12[%c0_61, %c0_62, %c0_63] : memref<1x64x32xbf16, #tpu.memory_space<vmem>>, vector<1x64x32xbf16>
    %167 = vector.shape_cast %166 : vector<1x64x32xbf16> to vector<64x32xbf16>
    %cst_64 = arith.constant dense<0.000000e+00> : vector<8x32xf32>
    %168 = tpu.matmul %165, %167, %cst_64 {dimension_numbers = #tpu.dot_dimension_numbers<[1], [0], [0], [1], [0, 0, 1, 1], [], []>} : vector<8x64xbf16>, vector<64x32xbf16>, vector<8x32xf32> -> vector<8x32xf32>
    %c0_65 = arith.constant 0 : index
    %c0_66 = arith.constant 0 : index
    %c0_67 = arith.constant 0 : index
    %169 = vector.load %arg13[%c0_65, %c0_66, %c0_67] : memref<1x1x32xf32, #tpu.memory_space<vmem>>, vector<1x1x32xf32>
    %170 = vector.shape_cast %169 : vector<1x1x32xf32> to vector<1x32xf32>
    %171 = vector.broadcast %170 : vector<1x32xf32> to vector<8x32xf32>
    %172 = arith.addf %168, %171 : vector<8x32xf32>
    %173 = arith.addf %172, %154 : vector<8x32xf32>
    %c0_68 = arith.constant 0 : index
    %c0_69 = arith.constant 0 : index
    %c0_70 = arith.constant 0 : index
    %174 = vector.load %arg14[%c0_68, %c0_69, %c0_70] : memref<1x1x32xf32, #tpu.memory_space<vmem>>, vector<1x1x32xf32>
    %175 = vector.shape_cast %174 : vector<1x1x32xf32> to vector<1x32xf32>
    %c0_71 = arith.constant 0 : index
    %c0_72 = arith.constant 0 : index
    %c0_73 = arith.constant 0 : index
    %176 = vector.load %arg15[%c0_71, %c0_72, %c0_73] : memref<1x1x32xf32, #tpu.memory_space<vmem>>, vector<1x1x32xf32>
    %177 = vector.shape_cast %176 : vector<1x1x32xf32> to vector<1x32xf32>
    %cst_74 = arith.constant dense<0.000000e+00> : vector<8xf32>
    %178 = vector.multi_reduction <add>, %173, %cst_74 [1] : vector<8x32xf32> to vector<8xf32>
    %179 = vector.shape_cast %178 : vector<8xf32> to vector<8x1xf32>
    %cst_75 = arith.constant 3.200000e+01 : f32
    %180 = vector.broadcast %cst_75 : f32 to vector<8x1xf32>
    %181 = arith.divf %179, %180 : vector<8x1xf32>
    %182 = vector.broadcast %181 : vector<8x1xf32> to vector<8x32xf32>
    %183 = arith.subf %173, %182 : vector<8x32xf32>
    %184 = arith.mulf %183, %183 : vector<8x32xf32>
    %cst_76 = arith.constant dense<0.000000e+00> : vector<8xf32>
    %185 = vector.multi_reduction <add>, %184, %cst_76 [1] : vector<8x32xf32> to vector<8xf32>
    %186 = vector.shape_cast %185 : vector<8xf32> to vector<8x1xf32>
    %cst_77 = arith.constant 3.200000e+01 : f32
    %187 = vector.broadcast %cst_77 : f32 to vector<8x1xf32>
    %188 = arith.divf %186, %187 : vector<8x1xf32>
    %189 = vector.broadcast %181 : vector<8x1xf32> to vector<8x32xf32>
    %190 = arith.subf %173, %189 : vector<8x32xf32>
    %cst_78 = arith.constant 9.99999974E-6 : f32
    %191 = vector.broadcast %cst_78 : f32 to vector<8x1xf32>
    %192 = arith.addf %188, %191 : vector<8x1xf32>
    %193 = math.rsqrt %192 : vector<8x1xf32>
    %194 = vector.broadcast %193 : vector<8x1xf32> to vector<8x32xf32>
    %195 = arith.mulf %190, %194 : vector<8x32xf32>
    %196 = vector.broadcast %175 : vector<1x32xf32> to vector<8x32xf32>
    %197 = arith.mulf %195, %196 : vector<8x32xf32>
    %198 = vector.broadcast %177 : vector<1x32xf32> to vector<8x32xf32>
    %199 = arith.addf %197, %198 : vector<8x32xf32>
    %200 = vector.shape_cast %199 : vector<8x32xf32> to vector<1x8x32xf32>
    %c0_79 = arith.constant 0 : index
    %c0_80 = arith.constant 0 : index
    %c0_81 = arith.constant 0 : index
    %201 = vector.load %arg16[%c0_79, %c0_80, %c0_81] : memref<1x8x32xf32, #tpu.memory_space<vmem>>, vector<1x8x32xf32>
    tpu.vector_store %arg16[%c0_79, %c0_80, %c0_81], %200 {strides = array<i32>} : memref<1x8x32xf32, #tpu.memory_space<vmem>>, vector<1x8x32xf32>,
    return
  }
  func.func @transform_0(%arg0: i32, %arg1: i32) -> (i32, i32, i32) {
    %c0_i32 = arith.constant 0 : i32
    %c0_i32_0 = arith.constant 0 : i32
    %c0_i32_1 = arith.constant 0 : i32
    return %arg0, %c0_i32, %c0_i32_0 : i32, i32, i32
  }
  func.func @transform_1(%arg0: i32, %arg1: i32) -> (i32, i32, i32) {
    %c0_i32 = arith.constant 0 : i32
    %c0_i32_0 = arith.constant 0 : i32
    %c0_i32_1 = arith.constant 0 : i32
    return %arg0, %c0_i32, %c0_i32_0 : i32, i32, i32
  }
  func.func @transform_2(%arg0: i32, %arg1: i32) -> (i32, i32, i32) {
    %c0_i32 = arith.constant 0 : i32
    %c0_i32_0 = arith.constant 0 : i32
    %c0_i32_1 = arith.constant 0 : i32
    return %arg1, %c0_i32, %c0_i32_0 : i32, i32, i32
  }
  func.func @transform_3(%arg0: i32, %arg1: i32) -> (i32, i32, i32) {
    %c0_i32 = arith.constant 0 : i32
    %c0_i32_0 = arith.constant 0 : i32
    %c0_i32_1 = arith.constant 0 : i32
    return %arg1, %c0_i32, %c0_i32_0 : i32, i32, i32
  }
  func.func @transform_4(%arg0: i32, %arg1: i32) -> (i32, i32, i32) {
    %c0_i32 = arith.constant 0 : i32
    %c0_i32_0 = arith.constant 0 : i32
    %c0_i32_1 = arith.constant 0 : i32
    return %arg1, %c0_i32, %c0_i32_0 : i32, i32, i32
  }
  func.func @transform_5(%arg0: i32, %arg1: i32) -> (i32, i32, i32) {
    %c0_i32 = arith.constant 0 : i32
    %c0_i32_0 = arith.constant 0 : i32
    %c0_i32_1 = arith.constant 0 : i32
    return %arg1, %c0_i32, %c0_i32_0 : i32, i32, i32
  }
  func.func @transform_6(%arg0: i32, %arg1: i32) -> (i32, i32, i32) {
    %c0_i32 = arith.constant 0 : i32
    %c0_i32_0 = arith.constant 0 : i32
    %c0_i32_1 = arith.constant 0 : i32
    return %arg1, %c0_i32, %c0_i32_0 : i32, i32, i32
  }
  func.func @transform_7(%arg0: i32, %arg1: i32) -> (i32, i32, i32) {
    %c0_i32 = arith.constant 0 : i32
    %c0_i32_0 = arith.constant 0 : i32
    %c0_i32_1 = arith.constant 0 : i32
    return %arg1, %c0_i32, %c0_i32_0 : i32, i32, i32
  }
  func.func @transform_8(%arg0: i32, %arg1: i32) -> (i32, i32, i32) {
    %c0_i32 = arith.constant 0 : i32
    %c0_i32_0 = arith.constant 0 : i32
    %c0_i32_1 = arith.constant 0 : i32
    return %arg1, %c0_i32, %c0_i32_0 : i32, i32, i32
  }
  func.func @transform_9(%arg0: i32, %arg1: i32) -> (i32, i32, i32) {
    %c0_i32 = arith.constant 0 : i32
    %c0_i32_0 = arith.constant 0 : i32
    %c0_i32_1 = arith.constant 0 : i32
    return %arg1, %c0_i32, %c0_i32_0 : i32, i32, i32
  }
  func.func @transform_10(%arg0: i32, %arg1: i32) -> (i32, i32, i32) {
    %c0_i32 = arith.constant 0 : i32
    %c0_i32_0 = arith.constant 0 : i32
    %c0_i32_1 = arith.constant 0 : i32
    return %arg1, %c0_i32, %c0_i32_0 : i32, i32, i32
  }
  func.func @transform_11(%arg0: i32, %arg1: i32) -> (i32, i32, i32) {
    %c0_i32 = arith.constant 0 : i32
    %c0_i32_0 = arith.constant 0 : i32
    %c0_i32_1 = arith.constant 0 : i32
    return %arg1, %c0_i32, %c0_i32_0 : i32, i32, i32
  }
  func.func @transform_12(%arg0: i32, %arg1: i32) -> (i32, i32, i32) {
    %c0_i32 = arith.constant 0 : i32
    %c0_i32_0 = arith.constant 0 : i32
    %c0_i32_1 = arith.constant 0 : i32
    return %arg1, %c0_i32, %c0_i32_0 : i32, i32, i32
  }
  func.func @transform_13(%arg0: i32, %arg1: i32) -> (i32, i32, i32) {
    %c0_i32 = arith.constant 0 : i32
    %c0_i32_0 = arith.constant 0 : i32
    %c0_i32_1 = arith.constant 0 : i32
    return %arg1, %c0_i32, %c0_i32_0 : i32, i32, i32
  }
  func.func @transform_14(%arg0: i32, %arg1: i32) -> (i32, i32, i32) {
    %c0_i32 = arith.constant 0 : i32
    %c0_i32_0 = arith.constant 0 : i32
    %c0_i32_1 = arith.constant 0 : i32
    return %arg0, %c0_i32, %c0_i32_0 : i32, i32, i32
  }
}

</mosaic_0001>

<llo_original>
// kernel: tpu_custom_call.1
$region0: #{tpu_custom_call.1}
  #allocation0 [shape = 'u32[]', space=smem, size = 0x4, offset = 0x4, fixed_abs, tag = 'smem constant byte address 0x4 - core index']
  #allocation1 [shape = 'u32[144,128]{1,0:T(1,128)}', space=vmem, size = 0x12000, scoped, tag = 'internal scratch']
  %s0 = inlined_call_operand.hbm [shape: f32[2,8,32], index: 0, kind: input, shape index: {}]
  %s1 = inlined_call_operand.hbm [shape: s32[2,1,1], index: 1, kind: input, shape index: {}]
  %s2 = inlined_call_operand.hbm [shape: bf16[2,32,32], index: 2, kind: input, shape index: {}]
  %s3 = inlined_call_operand.hbm [shape: bf16[2,32,32], index: 3, kind: input, shape index: {}]
  %s4 = inlined_call_operand.hbm [shape: bf16[2,32,32], index: 4, kind: input, shape index: {}]
  %s5 = inlined_call_operand.hbm [shape: bf16[2,32,32], index: 5, kind: input, shape index: {}]
  %s6 = inlined_call_operand.hbm [shape: f32[2,1,32], index: 6, kind: input, shape index: {}]
  %s7 = inlined_call_operand.hbm [shape: f32[2,1,32], index: 7, kind: input, shape index: {}]
  %s8 = inlined_call_operand.hbm [shape: bf16[2,32,64], index: 8, kind: input, shape index: {}]
  %s9 = inlined_call_operand.hbm [shape: f32[2,1,64], index: 9, kind: input, shape index: {}]
  %s10 = inlined_call_operand.hbm [shape: bf16[2,64,32], index: 10, kind: input, shape index: {}]
  %s11 = inlined_call_operand.hbm [shape: f32[2,1,32], index: 11, kind: input, shape index: {}]
  %s12 = inlined_call_operand.hbm [shape: f32[2,1,32], index: 12, kind: input, shape index: {}]
  %s13 = inlined_call_operand.hbm [shape: f32[2,1,32], index: 13, kind: input, shape index: {}]
  %s14 = inlined_call_operand.hbm [shape: f32[2,8,32], index: 14, kind: output, shape index: {}]
  %s15 = sld [smem:[#allocation0]]
  $region149: #{tpu_custom_call.1} parent=0
    _
  %s17 = ssub.s32 1, %s15
  %s18 = scalar_select 0, %s17, %s15
  $region1: #{tpu_custom_call.1} parent=0
    #allocation2 [shape = 'u8[8192]{0}', space=vmem, size = 0x2000, scoped, tag = 'input window, operand 0']
    #allocation3 [shape = 's32[2]{0}', space=sflag, size = 0x8, scoped, tag = 'scoped memory for tpu_custom_call.1']
    #allocation4 [shape = 's32[2]{0}', space=sflag, size = 0x8, scoped, tag = 'scoped memory for tpu_custom_call.1']
    #allocation5 [shape = 'u8[1024]{0}', space=vmem, size = 0x400, scoped, tag = 'input window, operand 1']
    #allocation6 [shape = 's32[2]{0}', space=sflag, size = 0x8, scoped, tag = 'scoped memory for tpu_custom_call.1']
    #allocation7 [shape = 'u8[16384]{0}', space=vmem, size = 0x4000, scoped, tag = 'input window, operand 2']
    #allocation8 [shape = 'u8[16384]{0}', space=vmem, size = 0x4000, scoped, tag = 'input window, operand 3']
    #allocation9 [shape = 's32[2]{0}', space=sflag, size = 0x8, scoped, tag = 'scoped memory for tpu_custom_call.1']
    #allocation10 [shape = 'u8[16384]{0}', space=vmem, size = 0x4000, scoped, tag = 'input window, operand 4']
    #allocation11 [shape = 'u8[16384]{0}', space=vmem, size = 0x4000, scoped, tag = 'input window, operand 5']
    #allocation12 [shape = 's32[2]{0}', space=sflag, size = 0x8, scoped, tag = 'scoped memory for tpu_custom_call.1']
    #allocation13 [shape = 'u8[1024]{0}', space=vmem, size = 0x400, scoped, tag = 'input window, operand 6']
    #allocation14 [shape = 'u8[1024]{0}', space=vmem, size = 0x400, scoped, tag = 'input window, operand 7']
    #allocation15 [shape = 's32[2]{0}', space=sflag, size = 0x8, scoped, tag = 'scoped memory for tpu_custom_call.1']
    #allocation16 [shape = 'u8[16384]{0}', space=vmem, size = 0x4000, scoped, tag = 'input window, operand 8']
    #allocation17 [shape = 'u8[1024]{0}', space=vmem, size = 0x400, scoped, tag = 'input window, operand 9']
    #allocation18 [shape = 's32[2]{0}', space=sflag, size = 0x8, scoped, tag = 'scoped memory for tpu_custom_call.1']
    #allocation19 [shape = 'u8[32768]{0}', space=vmem, size = 0x8000, scoped, tag = 'input window, operand 10']
    #allocation20 [shape = 'u8[1024]{0}', space=vmem, size = 0x400, scoped, tag = 'input window, operand 11']
    #allocation21 [shape = 's32[2]{0}', space=sflag, size = 0x8, scoped, tag = 'scoped memory for tpu_custom_call.1']
    #allocation22 [shape = 'u8[1024]{0}', space=vmem, size = 0x400, scoped, tag = 'input window, operand 12']
    #allocation23 [shape = 'u8[1024]{0}', space=vmem, size = 0x400, scoped, tag = 'input window, operand 13']
    #allocation24 [shape = 's32[2]{0}', space=sflag, size = 0x8, scoped, tag = 'scoped memory for tpu_custom_call.1']
    #allocation25 [shape = 'u8[8192]{0}', space=vmem, size = 0x2000, scoped, tag = 'output window, operand 0']
    %19 = vsyncpa [#allocation3], 0
    %s20 = scalar_lea.sflag [#allocation3], 1
    %21 = vsyncpa %s20, 0
    %22 = vsyncpa [#allocation6], 0
    %s23 = scalar_lea.sflag [#allocation6], 1
    %24 = vsyncpa %s23, 0
    %25 = vsyncpa [#allocation9], 0
    %s26 = scalar_lea.sflag [#allocation9], 1
    %27 = vsyncpa %s26, 0
    %28 = vsyncpa [#allocation12], 0
    %s29 = scalar_lea.sflag [#allocation12], 1
    %30 = vsyncpa %s29, 0
    %31 = vsyncpa [#allocation15], 0
    %s32 = scalar_lea.sflag [#allocation15], 1
    %33 = vsyncpa %s32, 0
    %34 = vsyncpa [#allocation18], 0
    %s35 = scalar_lea.sflag [#allocation18], 1
    %36 = vsyncpa %s35, 0
    %37 = vsyncpa [#allocation21], 0
    %s38 = scalar_lea.sflag [#allocation21], 1
    %39 = vsyncpa %s38, 0
    %40 = vsyncpa [#allocation24], 0
    %s41 = scalar_lea.sflag [#allocation24], 1
    %42 = vsyncpa %s41, 0
    %43 = vsyncpa [#allocation4], 0
    %s44 = scalar_lea.sflag [#allocation4], 1
    %45 = vsyncpa %s44, 0
    loop: start=0, step=1, limit=6
    $region2: #{tpu_custom_call.1} parent=1 // loop_pre_header
      _
    $region3: #{tpu_custom_call.1} parent=1 // loop_header
      %s47 = sphi 0, %s51
      %p48 = scmp.ge.s32.totalorder %s47, 6
      %s54 = sphi 0, %s66
      %s55 = sphi 0, %s62
      %s56 = sphi 0, %s54
      %s57 = sphi 0, %s55
      %s58 = sphi 0, %s56
      %s59 = sphi 0, %s57
      %s69 = sphi 0, %s71
      %s72 = sphi 0, %s69
      %s73 = sphi 0, %s72
      %s89 = sphi 0, %s73
      %s95 = sphi 0, %s97
      %s98 = sphi 0, %s95
      %s99 = sphi 0, %s98
      %s115 = sphi 0, %s99
      %s121 = sphi 0, %s123
      %s124 = sphi 0, %s121
      %s125 = sphi 0, %s124
      %s141 = sphi 0, %s125
      %s147 = sphi 0, %s149
      %s150 = sphi 0, %s147
      %s151 = sphi 0, %s150
      %s167 = sphi 0, %s151
      %s173 = sphi 0, %s175
      %s176 = sphi 0, %s173
      %s177 = sphi 0, %s176
      %s193 = sphi 0, %s177
      %s199 = sphi 0, %s201
      %s202 = sphi 0, %s199
      %s203 = sphi 0, %s202
      %s219 = sphi 0, %s203
      %s225 = sphi 0, %s227
      %s228 = sphi 0, %s225
      %s229 = sphi 0, %s228
      %s245 = sphi 0, %s229
      %s251 = sphi 0, %s253
      %s254 = sphi 0, %s251
      %s255 = sphi 0, %s254
      %s271 = sphi 0, %s255
      %s277 = sphi 0, %s279
      %s280 = sphi 0, %s277
      %s281 = sphi 0, %s280
      %s297 = sphi 0, %s281
      %s303 = sphi 0, %s305
      %s306 = sphi 0, %s303
      %s307 = sphi 0, %s306
      %s323 = sphi 0, %s307
      %s329 = sphi 0, %s331
      %s332 = sphi 0, %s329
      %s333 = sphi 0, %s332
      %s349 = sphi 0, %s333
      %s355 = sphi 0, %s357
      %s358 = sphi 0, %s355
      %s359 = sphi 0, %s358
      %s375 = sphi 0, %s359
      %s381 = sphi 0, %s383
      %s384 = sphi 0, %s381
      %s385 = sphi 0, %s384
      %s401 = sphi 0, %s385
      %s407 = sphi 0, %s409
      %s410 = sphi 0, %s407
      %s411 = sphi 0, %s410
      %s427 = sphi 0, %s411
      %s433 = sphi 0, %s435
      %s436 = sphi 0, %s433
      %s437 = sphi 0, %s436
      %s453 = sphi 0, %s437
    $region4: #{tpu_custom_call.1} parent=1 // loop_header_branch
      %50 = sbr.rel (%p48) target = $region8
    $region5: #{tpu_custom_call.1} parent=1 // loop_body
      %s52 = ssub.s32 %s47, 1
      %s53 = ssub.s32 %s47, 2
      %s60 = sadd.s32 1, %s55
      %p61 = scmp.ge.s32.totalorder %s60, 2
      %s62 = scalar_select %p61, 0, %s60
      %s63 = sadd.s32 1, %s54
      %s64 = scalar_select %p61, %s63, %s54
      %p65 = scmp.ge.s32.totalorder %s64, 2
      %s66 = scalar_select %p65, 0, %s64
      %s67 = ssub.s32 %s54, %s66
      %p68 = scmp.eq.s32.totalorder %s67, 0
      %s70 = sadd.s32 %s69, 1
      %s71 = scalar_select %p68, %s69, %s70
      %p74 = pneg %p68
      %p75 = scmp.eq.s32.totalorder %s47, 3
      %p76 = por %p74, %p75
      %p77 = scmp.ne.s32.totalorder %s69, %s72
      %p78 = scmp.eq.s32.totalorder %s47, 0
      %p79 = por %p77, %p78
      %p80 = scmp.ne.s32.totalorder %s69, %s72
      %p81 = scmp.eq.s32.totalorder %s52, 3
      %p82 = por %p80, %p81
      %p83 = scmp.ne.s32.totalorder %s72, %s73
      %p84 = scmp.eq.s32.totalorder %s52, 0
      %p85 = por %p83, %p84
      %p86 = scmp.ne.s32.totalorder %s72, %s73
      %p87 = scmp.eq.s32.totalorder %s53, 3
      %p88 = por %p86, %p87
      %p90 = scmp.ne.s32.totalorder %s73, %s89
      %p91 = scmp.eq.s32.totalorder %s53, 0
      %p92 = por %p90, %p91
      %s93 = ssub.s32 %s54, %s66
      %p94 = scmp.eq.s32.totalorder %s93, 0
      %s96 = sadd.s32 %s95, 1
      %s97 = scalar_select %p94, %s95, %s96
      %p100 = pneg %p94
      %p101 = scmp.eq.s32.totalorder %s47, 3
      %p102 = por %p100, %p101
      %p103 = scmp.ne.s32.totalorder %s95, %s98
      %p104 = scmp.eq.s32.totalorder %s47, 0
      %p105 = por %p103, %p104
      %p106 = scmp.ne.s32.totalorder %s95, %s98
      %p107 = scmp.eq.s32.totalorder %s52, 3
      %p108 = por %p106, %p107
      %p109 = scmp.ne.s32.totalorder %s98, %s99
      %p110 = scmp.eq.s32.totalorder %s52, 0
      %p111 = por %p109, %p110
      %p112 = scmp.ne.s32.totalorder %s98, %s99
      %p113 = scmp.eq.s32.totalorder %s53, 3
      %p114 = por %p112, %p113
      %p116 = scmp.ne.s32.totalorder %s99, %s115
      %p117 = scmp.eq.s32.totalorder %s53, 0
      %p118 = por %p116, %p117
      %s119 = ssub.s32 %s55, %s62
      %p120 = scmp.eq.s32.totalorder %s119, 0
      %s122 = sadd.s32 %s121, 1
      %s123 = scalar_select %p120, %s121, %s122
      %p126 = pneg %p120
      %p127 = scmp.eq.s32.totalorder %s47, 3
      %p128 = por %p126, %p127
      %p129 = scmp.ne.s32.totalorder %s121, %s124
      %p130 = scmp.eq.s32.totalorder %s47, 0
      %p131 = por %p129, %p130
      %p132 = scmp.ne.s32.totalorder %s121, %s124
      %p133 = scmp.eq.s32.totalorder %s52, 3
      %p134 = por %p132, %p133
      %p135 = scmp.ne.s32.totalorder %s124, %s125
      %p136 = scmp.eq.s32.totalorder %s52, 0
      %p137 = por %p135, %p136
      %p138 = scmp.ne.s32.totalorder %s124, %s125
      %p139 = scmp.eq.s32.totalorder %s53, 3
      %p140 = por %p138, %p139
      %p142 = scmp.ne.s32.totalorder %s125, %s141
      %p143 = scmp.eq.s32.totalorder %s53, 0
      %p144 = por %p142, %p143
      %s145 = ssub.s32 %s55, %s62
      %p146 = scmp.eq.s32.totalorder %s145, 0
      %s148 = sadd.s32 %s147, 1
      %s149 = scalar_select %p146, %s147, %s148
      %p152 = pneg %p146
      %p153 = scmp.eq.s32.totalorder %s47, 3
      %p154 = por %p152, %p153
      %p155 = scmp.ne.s32.totalorder %s147, %s150
      %p156 = scmp.eq.s32.totalorder %s47, 0
      %p157 = por %p155, %p156
      %p158 = scmp.ne.s32.totalorder %s147, %s150
      %p159 = scmp.eq.s32.totalorder %s52, 3
      %p160 = por %p158, %p159
      %p161 = scmp.ne.s32.totalorder %s150, %s151
      %p162 = scmp.eq.s32.totalorder %s52, 0
      %p163 = por %p161, %p162
      %p164 = scmp.ne.s32.totalorder %s150, %s151
      %p165 = scmp.eq.s32.totalorder %s53, 3
      %p166 = por %p164, %p165
      %p168 = scmp.ne.s32.totalorder %s151, %s167
      %p169 = scmp.eq.s32.totalorder %s53, 0
      %p170 = por %p168, %p169
      %s171 = ssub.s32 %s55, %s62
      %p172 = scmp.eq.s32.totalorder %s171, 0
      %s174 = sadd.s32 %s173, 1
      %s175 = scalar_select %p172, %s173, %s174
      %p178 = pneg %p172
      %p179 = scmp.eq.s32.totalorder %s47, 3
      %p180 = por %p178, %p179
      %p181 = scmp.ne.s32.totalorder %s173, %s176
      %p182 = scmp.eq.s32.totalorder %s47, 0
      %p183 = por %p181, %p182
      %p184 = scmp.ne.s32.totalorder %s173, %s176
      %p185 = scmp.eq.s32.totalorder %s52, 3
      %p186 = por %p184, %p185
      %p187 = scmp.ne.s32.totalorder %s176, %s177
      %p188 = scmp.eq.s32.totalorder %s52, 0
      %p189 = por %p187, %p188
      %p190 = scmp.ne.s32.totalorder %s176, %s177
      %p191 = scmp.eq.s32.totalorder %s53, 3
      %p192 = por %p190, %p191
      %p194 = scmp.ne.s32.totalorder %s177, %s193
      %p195 = scmp.eq.s32.totalorder %s53, 0
      %p196 = por %p194, %p195
      %s197 = ssub.s32 %s55, %s62
      %p198 = scmp.eq.s32.totalorder %s197, 0
      %s200 = sadd.s32 %s199, 1
      %s201 = scalar_select %p198, %s199, %s200
      %p204 = pneg %p198
      %p205 = scmp.eq.s32.totalorder %s47, 3
      %p206 = por %p204, %p205
      %p207 = scmp.ne.s32.totalorder %s199, %s202
      %p208 = scmp.eq.s32.totalorder %s47, 0
      %p209 = por %p207, %p208
      %p210 = scmp.ne.s32.totalorder %s199, %s202
      %p211 = scmp.eq.s32.totalorder %s52, 3
      %p212 = por %p210, %p211
      %p213 = scmp.ne.s32.totalorder %s202, %s203
      %p214 = scmp.eq.s32.totalorder %s52, 0
      %p215 = por %p213, %p214
      %p216 = scmp.ne.s32.totalorder %s202, %s203
      %p217 = scmp.eq.s32.totalorder %s53, 3
      %p218 = por %p216, %p217
      %p220 = scmp.ne.s32.totalorder %s203, %s219
      %p221 = scmp.eq.s32.totalorder %s53, 0
      %p222 = por %p220, %p221
      %s223 = ssub.s32 %s55, %s62
      %p224 = scmp.eq.s32.totalorder %s223, 0
      %s226 = sadd.s32 %s225, 1
      %s227 = scalar_select %p224, %s225, %s226
      %p230 = pneg %p224
      %p231 = scmp.eq.s32.totalorder %s47, 3
      %p232 = por %p230, %p231
      %p233 = scmp.ne.s32.totalorder %s225, %s228
      %p234 = scmp.eq.s32.totalorder %s47, 0
      %p235 = por %p233, %p234
      %p236 = scmp.ne.s32.totalorder %s225, %s228
      %p237 = scmp.eq.s32.totalorder %s52, 3
      %p238 = por %p236, %p237
      %p239 = scmp.ne.s32.totalorder %s228, %s229
      %p240 = scmp.eq.s32.totalorder %s52, 0
      %p241 = por %p239, %p240
      %p242 = scmp.ne.s32.totalorder %s228, %s229
      %p243 = scmp.eq.s32.totalorder %s53, 3
      %p244 = por %p242, %p243
      %p246 = scmp.ne.s32.totalorder %s229, %s245
      %p247 = scmp.eq.s32.totalorder %s53, 0
      %p248 = por %p246, %p247
      %s249 = ssub.s32 %s55, %s62
      %p250 = scmp.eq.s32.totalorder %s249, 0
      %s252 = sadd.s32 %s251, 1
      %s253 = scalar_select %p250, %s251, %s252
      %p256 = pneg %p250
      %p257 = scmp.eq.s32.totalorder %s47, 3
      %p258 = por %p256, %p257
      %p259 = scmp.ne.s32.totalorder %s251, %s254
      %p260 = scmp.eq.s32.totalorder %s47, 0
      %p261 = por %p259, %p260
      %p262 = scmp.ne.s32.totalorder %s251, %s254
      %p263 = scmp.eq.s32.totalorder %s52, 3
      %p264 = por %p262, %p263
      %p265 = scmp.ne.s32.totalorder %s254, %s255
      %p266 = scmp.eq.s32.totalorder %s52, 0
      %p267 = por %p265, %p266
      %p268 = scmp.ne.s32.totalorder %s254, %s255
      %p269 = scmp.eq.s32.totalorder %s53, 3
      %p270 = por %p268, %p269
      %p272 = scmp.ne.s32.totalorder %s255, %s271
      %p273 = scmp.eq.s32.totalorder %s53, 0
      %p274 = por %p272, %p273
      %s275 = ssub.s32 %s55, %s62
      %p276 = scmp.eq.s32.totalorder %s275, 0
      %s278 = sadd.s32 %s277, 1
      %s279 = scalar_select %p276, %s277, %s278
      %p282 = pneg %p276
      %p283 = scmp.eq.s32.totalorder %s47, 3
      %p284 = por %p282, %p283
      %p285 = scmp.ne.s32.totalorder %s277, %s280
      %p286 = scmp.eq.s32.totalorder %s47, 0
      %p287 = por %p285, %p286
      %p288 = scmp.ne.s32.totalorder %s277, %s280
      %p289 = scmp.eq.s32.totalorder %s52, 3
      %p290 = por %p288, %p289
      %p291 = scmp.ne.s32.totalorder %s280, %s281
      %p292 = scmp.eq.s32.totalorder %s52, 0
      %p293 = por %p291, %p292
      %p294 = scmp.ne.s32.totalorder %s280, %s281
      %p295 = scmp.eq.s32.totalorder %s53, 3
      %p296 = por %p294, %p295
      %p298 = scmp.ne.s32.totalorder %s281, %s297
      %p299 = scmp.eq.s32.totalorder %s53, 0
      %p300 = por %p298, %p299
      %s301 = ssub.s32 %s55, %s62
      %p302 = scmp.eq.s32.totalorder %s301, 0
      %s304 = sadd.s32 %s303, 1
      %s305 = scalar_select %p302, %s303, %s304
      %p308 = pneg %p302
      %p309 = scmp.eq.s32.totalorder %s47, 3
      %p310 = por %p308, %p309
      %p311 = scmp.ne.s32.totalorder %s303, %s306
      %p312 = scmp.eq.s32.totalorder %s47, 0
      %p313 = por %p311, %p312
      %p314 = scmp.ne.s32.totalorder %s303, %s306
      %p315 = scmp.eq.s32.totalorder %s52, 3
      %p316 = por %p314, %p315
      %p317 = scmp.ne.s32.totalorder %s306, %s307
      %p318 = scmp.eq.s32.totalorder %s52, 0
      %p319 = por %p317, %p318
      %p320 = scmp.ne.s32.totalorder %s306, %s307
      %p321 = scmp.eq.s32.totalorder %s53, 3
      %p322 = por %p320, %p321
      %p324 = scmp.ne.s32.totalorder %s307, %s323
      %p325 = scmp.eq.s32.totalorder %s53, 0
      %p326 = por %p324, %p325
      %s327 = ssub.s32 %s55, %s62
      %p328 = scmp.eq.s32.totalorder %s327, 0
      %s330 = sadd.s32 %s329, 1
      %s331 = scalar_select %p328, %s329, %s330
      %p334 = pneg %p328
      %p335 = scmp.eq.s32.totalorder %s47, 3
      %p336 = por %p334, %p335
      %p337 = scmp.ne.s32.totalorder %s329, %s332
      %p338 = scmp.eq.s32.totalorder %s47, 0
      %p339 = por %p337, %p338
      %p340 = scmp.ne.s32.totalorder %s329, %s332
      %p341 = scmp.eq.s32.totalorder %s52, 3
      %p342 = por %p340, %p341
      %p343 = scmp.ne.s32.totalorder %s332, %s333
      %p344 = scmp.eq.s32.totalorder %s52, 0
      %p345 = por %p343, %p344
      %p346 = scmp.ne.s32.totalorder %s332, %s333
      %p347 = scmp.eq.s32.totalorder %s53, 3
      %p348 = por %p346, %p347
      %p350 = scmp.ne.s32.totalorder %s333, %s349
      %p351 = scmp.eq.s32.totalorder %s53, 0
      %p352 = por %p350, %p351
      %s353 = ssub.s32 %s55, %s62
      %p354 = scmp.eq.s32.totalorder %s353, 0
      %s356 = sadd.s32 %s355, 1
      %s357 = scalar_select %p354, %s355, %s356
      %p360 = pneg %p354
      %p361 = scmp.eq.s32.totalorder %s47, 3
      %p362 = por %p360, %p361
      %p363 = scmp.ne.s32.totalorder %s355, %s358
      %p364 = scmp.eq.s32.totalorder %s47, 0
      %p365 = por %p363, %p364
      %p366 = scmp.ne.s32.totalorder %s355, %s358
      %p367 = scmp.eq.s32.totalorder %s52, 3
      %p368 = por %p366, %p367
      %p369 = scmp.ne.s32.totalorder %s358, %s359
      %p370 = scmp.eq.s32.totalorder %s52, 0
      %p371 = por %p369, %p370
      %p372 = scmp.ne.s32.totalorder %s358, %s359
      %p373 = scmp.eq.s32.totalorder %s53, 3
      %p374 = por %p372, %p373
      %p376 = scmp.ne.s32.totalorder %s359, %s375
      %p377 = scmp.eq.s32.totalorder %s53, 0
      %p378 = por %p376, %p377
      %s379 = ssub.s32 %s55, %s62
      %p380 = scmp.eq.s32.totalorder %s379, 0
      %s382 = sadd.s32 %s381, 1
      %s383 = scalar_select %p380, %s381, %s382
      %p386 = pneg %p380
      %p387 = scmp.eq.s32.totalorder %s47, 3
      %p388 = por %p386, %p387
      %p389 = scmp.ne.s32.totalorder %s381, %s384
      %p390 = scmp.eq.s32.totalorder %s47, 0
      %p391 = por %p389, %p390
      %p392 = scmp.ne.s32.totalorder %s381, %s384
      %p393 = scmp.eq.s32.totalorder %s52, 3
      %p394 = por %p392, %p393
      %p395 = scmp.ne.s32.totalorder %s384, %s385
      %p396 = scmp.eq.s32.totalorder %s52, 0
      %p397 = por %p395, %p396
      %p398 = scmp.ne.s32.totalorder %s384, %s385
      %p399 = scmp.eq.s32.totalorder %s53, 3
      %p400 = por %p398, %p399
      %p402 = scmp.ne.s32.totalorder %s385, %s401
      %p403 = scmp.eq.s32.totalorder %s53, 0
      %p404 = por %p402, %p403
      %s405 = ssub.s32 %s55, %s62
      %p406 = scmp.eq.s32.totalorder %s405, 0
      %s408 = sadd.s32 %s407, 1
      %s409 = scalar_select %p406, %s407, %s408
      %p412 = pneg %p406
      %p413 = scmp.eq.s32.totalorder %s47, 3
      %p414 = por %p412, %p413
      %p415 = scmp.ne.s32.totalorder %s407, %s410
      %p416 = scmp.eq.s32.totalorder %s47, 0
      %p417 = por %p415, %p416
      %p418 = scmp.ne.s32.totalorder %s407, %s410
      %p419 = scmp.eq.s32.totalorder %s52, 3
      %p420 = por %p418, %p419
      %p421 = scmp.ne.s32.totalorder %s410, %s411
      %p422 = scmp.eq.s32.totalorder %s52, 0
      %p423 = por %p421, %p422
      %p424 = scmp.ne.s32.totalorder %s410, %s411
      %p425 = scmp.eq.s32.totalorder %s53, 3
      %p426 = por %p424, %p425
      %p428 = scmp.ne.s32.totalorder %s411, %s427
      %p429 = scmp.eq.s32.totalorder %s53, 0
      %p430 = por %p428, %p429
      %s431 = ssub.s32 %s54, %s66
      %p432 = scmp.eq.s32.totalorder %s431, 0
      %s434 = sadd.s32 %s433, 1
      %s435 = scalar_select %p432, %s433, %s434
      %p438 = pneg %p432
      %p439 = scmp.eq.s32.totalorder %s47, 3
      %p440 = por %p438, %p439
      %p441 = scmp.ne.s32.totalorder %s433, %s436
      %p442 = scmp.eq.s32.totalorder %s47, 0
      %p443 = por %p441, %p442
      %p444 = scmp.ne.s32.totalorder %s433, %s436
      %p445 = scmp.eq.s32.totalorder %s52, 3
      %p446 = por %p444, %p445
      %p447 = scmp.ne.s32.totalorder %s436, %s437
      %p448 = scmp.eq.s32.totalorder %s52, 0
      %p449 = por %p447, %p448
      %p450 = scmp.ne.s32.totalorder %s436, %s437
      %p451 = scmp.eq.s32.totalorder %s53, 3
      %p452 = por %p450, %p451
      %p454 = scmp.ne.s32.totalorder %s437, %s453
      %p455 = scmp.eq.s32.totalorder %s53, 0
      %p456 = por %p454, %p455
      %p457 = scmp.le.s32.totalorder 1, %s47
      %p458 = scmp.lt.s32.totalorder %s47, 5
      %p459 = pnand %p457, %p458
      %p460 = pneg %p459
      // Predicated region
      $region9: #{tpu_custom_call.1} parent=5 // pred_check
        _
      $region10: #{tpu_custom_call.1} parent=5 // pred_check_branch
        %462 = sbr.rel (%p459) target = $region12
      $region11: #{tpu_custom_call.1} parent=5 // pred_region
        %s463 = ssub.s32 %s47, 1
      $region12: #{tpu_custom_call.1} parent=5 // pred_fallthru
        _
      %p464 = scmp.lt.s32.totalorder %s47, 4
      // Predicated region
      $region13: #{tpu_custom_call.1} parent=5 // pred_check
        %p465 = pneg %p464
      $region14: #{tpu_custom_call.1} parent=5 // pred_check_branch
        %467 = sbr.rel (%p465) target = $region16
      $region15: #{tpu_custom_call.1} parent=5 // pred_region
        // Predicated region
        $region17: #{tpu_custom_call.1} parent=15 // pred_check
          %p468 = pneg %p79
        $region18: #{tpu_custom_call.1} parent=15 // pred_check_branch
          %470 = sbr.rel (%p468) target = $region20
        $region19: #{tpu_custom_call.1} parent=15 // pred_region
          %s471 = sand.u32 %s69, 1
          %s472 = scalar_lea.sflag [#allocation3], %s471
          %s473 = sand.u32 %s69, 1
          %s474 = smul.addr %s473, 8
          %s475 = scalar_lea.vmem [#allocation2], %s474
          %s477 = ssub.s32 128, 128
          %478 = vsyncadd %s472, %s477
          %s479 = smul.addr %s54, 128
          %s480 = scalar_lea.hbm %s0, %s479
          %s482 = sshll.u32 %s475, 4
          %s483 = int_to_ptr.vmem [resolvable:$true] %s482
          %485 = dma.hbm_to_vmem [thread:$0]  %s480, 128, %s483, %s472
        $region20: #{tpu_custom_call.1} parent=15 // pred_fallthru
          _
        // Predicated region
        $region21: #{tpu_custom_call.1} parent=15 // pred_check
          %p486 = pneg %p105
        $region22: #{tpu_custom_call.1} parent=15 // pred_check_branch
          %488 = sbr.rel (%p486) target = $region24
        $region23: #{tpu_custom_call.1} parent=15 // pred_region
          %s489 = sand.u32 %s47, 1
          %s490 = scalar_lea.sflag [#allocation6], %s489
          %s491 = sand.u32 %s95, 1
          %s492 = scalar_lea.vmem [#allocation5], %s491
          %s494 = ssub.s32 16, 16
          %495 = vsyncadd %s490, %s494
          %s496 = smul.addr %s54, 16
          %s497 = scalar_lea.hbm %s1, %s496
          %s499 = sshll.u32 %s492, 4
          %s500 = int_to_ptr.vmem [resolvable:$true] %s499
          %502 = dma.hbm_to_vmem [thread:$0]  %s497, 16, %s500, %s490
        $region24: #{tpu_custom_call.1} parent=15 // pred_fallthru
          _
        // Predicated region
        $region25: #{tpu_custom_call.1} parent=15 // pred_check
          %p503 = pneg %p131
        $region26: #{tpu_custom_call.1} parent=15 // pred_check_branch
          %505 = sbr.rel (%p503) target = $region28
        $region27: #{tpu_custom_call.1} parent=15 // pred_region
          %s506 = sand.u32 %s47, 1
          %s507 = scalar_lea.sflag [#allocation6], %s506
          %s508 = sand.u32 %s121, 1
          %s509 = smul.addr %s508, 16
          %s510 = scalar_lea.vmem [#allocation7], %s509
          %s512 = ssub.s32 256, 256
          %513 = vsyncadd %s507, %s512
          %s514 = smul.addr %s55, 4
          %s515 = smul.addr %s514, 64
          %s516 = scalar_lea.hbm %s2, %s515
          %s517 = sshll.u32 %s510, 4
          %s518 = int_to_ptr.vmem [resolvable:$true] %s517
          %523 = dma.hbm_to_vmem [thread:$0]  %s516, 256, %s518, %s507, 64, 64, 4
        $region28: #{tpu_custom_call.1} parent=15 // pred_fallthru
          _
        // Predicated region
        $region29: #{tpu_custom_call.1} parent=15 // pred_check
          %p524 = pneg %p157
        $region30: #{tpu_custom_call.1} parent=15 // pred_check_branch
          %526 = sbr.rel (%p524) target = $region32
        $region31: #{tpu_custom_call.1} parent=15 // pred_region
          %s527 = sand.u32 %s47, 1
          %s528 = scalar_lea.sflag [#allocation9], %s527
          %s529 = sand.u32 %s147, 1
          %s530 = smul.addr %s529, 16
          %s531 = scalar_lea.vmem [#allocation8], %s530
          %s533 = ssub.s32 256, 256
          %534 = vsyncadd %s528, %s533
          %s535 = smul.addr %s55, 4
          %s536 = smul.addr %s535, 64
          %s537 = scalar_lea.hbm %s3, %s536
          %s538 = sshll.u32 %s531, 4
          %s539 = int_to_ptr.vmem [resolvable:$true] %s538
          %544 = dma.hbm_to_vmem [thread:$0]  %s537, 256, %s539, %s528, 64, 64, 4
        $region32: #{tpu_custom_call.1} parent=15 // pred_fallthru
          _
        // Predicated region
        $region33: #{tpu_custom_call.1} parent=15 // pred_check
          %p545 = pneg %p183
        $region34: #{tpu_custom_call.1} parent=15 // pred_check_branch
          %547 = sbr.rel (%p545) target = $region36
        $region35: #{tpu_custom_call.1} parent=15 // pred_region
          %s548 = sand.u32 %s47, 1
          %s549 = scalar_lea.sflag [#allocation9], %s548
          %s550 = sand.u32 %s173, 1
          %s551 = smul.addr %s550, 16
          %s552 = scalar_lea.vmem [#allocation10], %s551
          %s554 = ssub.s32 256, 256
          %555 = vsyncadd %s549, %s554
          %s556 = smul.addr %s55, 4
          %s557 = smul.addr %s556, 64
          %s558 = scalar_lea.hbm %s4, %s557
          %s559 = sshll.u32 %s552, 4
          %s560 = int_to_ptr.vmem [resolvable:$true] %s559
          %565 = dma.hbm_to_vmem [thread:$0]  %s558, 256, %s560, %s549, 64, 64, 4
        $region36: #{tpu_custom_call.1} parent=15 // pred_fallthru
          _
        // Predicated region
        $region37: #{tpu_custom_call.1} parent=15 // pred_check
          %p566 = pneg %p209
        $region38: #{tpu_custom_call.1} parent=15 // pred_check_branch
          %568 = sbr.rel (%p566) target = $region40
        $region39: #{tpu_custom_call.1} parent=15 // pred_region
          %s569 = sand.u32 %s47, 1
          %s570 = scalar_lea.sflag [#allocation12], %s569
          %s571 = sand.u32 %s199, 1
          %s572 = smul.addr %s571, 16
          %s573 = scalar_lea.vmem [#allocation11], %s572
          %s575 = ssub.s32 256, 256
          %576 = vsyncadd %s570, %s575
          %s577 = smul.addr %s55, 4
          %s578 = smul.addr %s577, 64
          %s579 = scalar_lea.hbm %s5, %s578
          %s580 = sshll.u32 %s573, 4
          %s581 = int_to_ptr.vmem [resolvable:$true] %s580
          %586 = dma.hbm_to_vmem [thread:$0]  %s579, 256, %s581, %s570, 64, 64, 4
        $region40: #{tpu_custom_call.1} parent=15 // pred_fallthru
          _
        // Predicated region
        $region41: #{tpu_custom_call.1} parent=15 // pred_check
          %p587 = pneg %p235
        $region42: #{tpu_custom_call.1} parent=15 // pred_check_branch
          %589 = sbr.rel (%p587) target = $region44
        $region43: #{tpu_custom_call.1} parent=15 // pred_region
          %s590 = sand.u32 %s47, 1
          %s591 = scalar_lea.sflag [#allocation12], %s590
          %s592 = sand.u32 %s225, 1
          %s593 = scalar_lea.vmem [#allocation13], %s592
          %s595 = ssub.s32 16, 16
          %596 = vsyncadd %s591, %s595
          %s597 = smul.addr %s55, 16
          %s598 = scalar_lea.hbm %s6, %s597
          %s600 = sshll.u32 %s593, 4
          %s601 = int_to_ptr.vmem [resolvable:$true] %s600
          %603 = dma.hbm_to_vmem [thread:$0]  %s598, 16, %s601, %s591
        $region44: #{tpu_custom_call.1} parent=15 // pred_fallthru
          _
        // Predicated region
        $region45: #{tpu_custom_call.1} parent=15 // pred_check
          %p604 = pneg %p261
        $region46: #{tpu_custom_call.1} parent=15 // pred_check_branch
          %606 = sbr.rel (%p604) target = $region48
        $region47: #{tpu_custom_call.1} parent=15 // pred_region
          %s607 = sand.u32 %s47, 1
          %s608 = scalar_lea.sflag [#allocation15], %s607
          %s609 = sand.u32 %s251, 1
          %s610 = scalar_lea.vmem [#allocation14], %s609
          %s612 = ssub.s32 16, 16
          %613 = vsyncadd %s608, %s612
          %s614 = smul.addr %s55, 16
          %s615 = scalar_lea.hbm %s7, %s614
          %s617 = sshll.u32 %s610, 4
          %s618 = int_to_ptr.vmem [resolvable:$true] %s617
          %620 = dma.hbm_to_vmem [thread:$0]  %s615, 16, %s618, %s608
        $region48: #{tpu_custom_call.1} parent=15 // pred_fallthru
          _
        // Predicated region
        $region49: #{tpu_custom_call.1} parent=15 // pred_check
          %p621 = pneg %p287
        $region50: #{tpu_custom_call.1} parent=15 // pred_check_branch
          %623 = sbr.rel (%p621) target = $region52
        $region51: #{tpu_custom_call.1} parent=15 // pred_region
          %s624 = sand.u32 %s47, 1
          %s625 = scalar_lea.sflag [#allocation15], %s624
          %s626 = sand.u32 %s277, 1
          %s627 = smul.addr %s626, 16
          %s628 = scalar_lea.vmem [#allocation16], %s627
          %s630 = ssub.s32 256, 256
          %631 = vsyncadd %s625, %s630
          %s632 = smul.addr %s55, 4
          %s633 = smul.addr %s632, 64
          %s634 = scalar_lea.hbm %s8, %s633
          %s635 = sshll.u32 %s628, 4
          %s636 = int_to_ptr.vmem [resolvable:$true] %s635
          %641 = dma.hbm_to_vmem [thread:$0]  %s634, 256, %s636, %s625, 64, 64, 4
        $region52: #{tpu_custom_call.1} parent=15 // pred_fallthru
          _
        // Predicated region
        $region53: #{tpu_custom_call.1} parent=15 // pred_check
          %p642 = pneg %p313
        $region54: #{tpu_custom_call.1} parent=15 // pred_check_branch
          %644 = sbr.rel (%p642) target = $region56
        $region55: #{tpu_custom_call.1} parent=15 // pred_region
          %s645 = sand.u32 %s47, 1
          %s646 = scalar_lea.sflag [#allocation18], %s645
          %s647 = sand.u32 %s303, 1
          %s648 = scalar_lea.vmem [#allocation17], %s647
          %s650 = ssub.s32 16, 16
          %651 = vsyncadd %s646, %s650
          %s652 = smul.addr %s55, 16
          %s653 = scalar_lea.hbm %s9, %s652
          %s655 = sshll.u32 %s648, 4
          %s656 = int_to_ptr.vmem [resolvable:$true] %s655
          %658 = dma.hbm_to_vmem [thread:$0]  %s653, 16, %s656, %s646
        $region56: #{tpu_custom_call.1} parent=15 // pred_fallthru
          _
        // Predicated region
        $region57: #{tpu_custom_call.1} parent=15 // pred_check
          %p659 = pneg %p339
        $region58: #{tpu_custom_call.1} parent=15 // pred_check_branch
          %661 = sbr.rel (%p659) target = $region60
        $region59: #{tpu_custom_call.1} parent=15 // pred_region
          %s662 = sand.u32 %s47, 1
          %s663 = scalar_lea.sflag [#allocation18], %s662
          %s664 = sand.u32 %s329, 1
          %s665 = smul.addr %s664, 32
          %s666 = scalar_lea.vmem [#allocation19], %s665
          %s668 = ssub.s32 512, 512
          %669 = vsyncadd %s663, %s668
          %s670 = smul.addr %s55, 8
          %s671 = smul.addr %s670, 64
          %s672 = scalar_lea.hbm %s10, %s671
          %s673 = sshll.u32 %s666, 4
          %s674 = int_to_ptr.vmem [resolvable:$true] %s673
          %679 = dma.hbm_to_vmem [thread:$0]  %s672, 512, %s674, %s663, 64, 64, 4
        $region60: #{tpu_custom_call.1} parent=15 // pred_fallthru
          _
        // Predicated region
        $region61: #{tpu_custom_call.1} parent=15 // pred_check
          %p680 = pneg %p365
        $region62: #{tpu_custom_call.1} parent=15 // pred_check_branch
          %682 = sbr.rel (%p680) target = $region64
        $region63: #{tpu_custom_call.1} parent=15 // pred_region
          %s683 = sand.u32 %s47, 1
          %s684 = scalar_lea.sflag [#allocation21], %s683
          %s685 = sand.u32 %s355, 1
          %s686 = scalar_lea.vmem [#allocation20], %s685
          %s688 = ssub.s32 16, 16
          %689 = vsyncadd %s684, %s688
          %s690 = smul.addr %s55, 16
          %s691 = scalar_lea.hbm %s11, %s690
          %s693 = sshll.u32 %s686, 4
          %s694 = int_to_ptr.vmem [resolvable:$true] %s693
          %696 = dma.hbm_to_vmem [thread:$0]  %s691, 16, %s694, %s684
        $region64: #{tpu_custom_call.1} parent=15 // pred_fallthru
          _
        // Predicated region
        $region65: #{tpu_custom_call.1} parent=15 // pred_check
          %p697 = pneg %p391
        $region66: #{tpu_custom_call.1} parent=15 // pred_check_branch
          %699 = sbr.rel (%p697) target = $region68
        $region67: #{tpu_custom_call.1} parent=15 // pred_region
          %s700 = sand.u32 %s47, 1
          %s701 = scalar_lea.sflag [#allocation21], %s700
          %s702 = sand.u32 %s381, 1
          %s703 = scalar_lea.vmem [#allocation22], %s702
          %s705 = ssub.s32 16, 16
          %706 = vsyncadd %s701, %s705
          %s707 = smul.addr %s55, 16
          %s708 = scalar_lea.hbm %s12, %s707
          %s710 = sshll.u32 %s703, 4
          %s711 = int_to_ptr.vmem [resolvable:$true] %s710
          %713 = dma.hbm_to_vmem [thread:$0]  %s708, 16, %s711, %s701
        $region68: #{tpu_custom_call.1} parent=15 // pred_fallthru
          _
        // Predicated region
        $region69: #{tpu_custom_call.1} parent=15 // pred_check
          %p714 = pneg %p417
        $region70: #{tpu_custom_call.1} parent=15 // pred_check_branch
          %716 = sbr.rel (%p714) target = $region72
        $region71: #{tpu_custom_call.1} parent=15 // pred_region
          %s717 = sand.u32 %s407, 1
          %s718 = scalar_lea.sflag [#allocation24], %s717
          %s719 = sand.u32 %s407, 1
          %s720 = scalar_lea.vmem [#allocation23], %s719
          %s722 = ssub.s32 16, 16
          %723 = vsyncadd %s718, %s722
          %s724 = smul.addr %s55, 16
          %s725 = scalar_lea.hbm %s13, %s724
          %s727 = sshll.u32 %s720, 4
          %s728 = int_to_ptr.vmem [resolvable:$true] %s727
          %730 = dma.hbm_to_vmem [thread:$0]  %s725, 16, %s728, %s718
        $region72: #{tpu_custom_call.1} parent=15 // pred_fallthru
          _
      $region16: #{tpu_custom_call.1} parent=5 // pred_fallthru
        _
      %p731 = scmp.le.s32.totalorder 1, %s47
      %p732 = scmp.lt.s32.totalorder %s47, 5
      %p733 = pnand %p731, %p732
      %p734 = pneg %p733
      // Predicated region
      $region73: #{tpu_custom_call.1} parent=5 // pred_check
        _
      $region74: #{tpu_custom_call.1} parent=5 // pred_check_branch
        %736 = sbr.rel (%p733) target = $region76
      $region75: #{tpu_custom_call.1} parent=5 // pred_region
        %s737 = ssub.s32 %s47, 1
        %s738 = sand.u32 %s72, 1
        %s739 = scalar_lea.sflag [#allocation3], %s738
        %s740 = sand.u32 %s72, 1
        %s741 = smul.addr %s740, 8
        %s742 = scalar_lea.vmem [#allocation2], %s741
        // Predicated region
        $region77: #{tpu_custom_call.1} parent=75 // pred_check
          %p743 = pneg %p85
        $region78: #{tpu_custom_call.1} parent=75 // pred_check_branch
          %745 = sbr.rel (%p743) target = $region80
        $region79: #{tpu_custom_call.1} parent=75 // pred_region
          %746 = dma.done %s739, 128
        $region80: #{tpu_custom_call.1} parent=75 // pred_fallthru
          _
        %s747 = sand.u32 %s52, 1
        %s748 = scalar_lea.sflag [#allocation6], %s747
        %s749 = sand.u32 %s98, 1
        %s750 = scalar_lea.vmem [#allocation5], %s749
        // Predicated region
        $region81: #{tpu_custom_call.1} parent=75 // pred_check
          %p751 = pneg %p111
        $region82: #{tpu_custom_call.1} parent=75 // pred_check_branch
          %753 = sbr.rel (%p751) target = $region84
        $region83: #{tpu_custom_call.1} parent=75 // pred_region
          %754 = dma.done %s748, 16
        $region84: #{tpu_custom_call.1} parent=75 // pred_fallthru
          _
        %s755 = sand.u32 %s52, 1
        %s756 = scalar_lea.sflag [#allocation6], %s755
        %s757 = sand.u32 %s124, 1
        %s758 = smul.addr %s757, 16
        %s759 = scalar_lea.vmem [#allocation7], %s758
        // Predicated region
        $region85: #{tpu_custom_call.1} parent=75 // pred_check
          %p760 = pneg %p137
        $region86: #{tpu_custom_call.1} parent=75 // pred_check_branch
          %762 = sbr.rel (%p760) target = $region88
        $region87: #{tpu_custom_call.1} parent=75 // pred_region
          %763 = dma.done %s756, 256
        $region88: #{tpu_custom_call.1} parent=75 // pred_fallthru
          _
        %s764 = sand.u32 %s52, 1
        %s765 = scalar_lea.sflag [#allocation9], %s764
        %s766 = sand.u32 %s150, 1
        %s767 = smul.addr %s766, 16
        %s768 = scalar_lea.vmem [#allocation8], %s767
        // Predicated region
        $region89: #{tpu_custom_call.1} parent=75 // pred_check
          %p769 = pneg %p163
        $region90: #{tpu_custom_call.1} parent=75 // pred_check_branch
          %771 = sbr.rel (%p769) target = $region92
        $region91: #{tpu_custom_call.1} parent=75 // pred_region
          %772 = dma.done %s765, 256
        $region92: #{tpu_custom_call.1} parent=75 // pred_fallthru
          _
        %s773 = sand.u32 %s52, 1
        %s774 = scalar_lea.sflag [#allocation9], %s773
        %s775 = sand.u32 %s176, 1
        %s776 = smul.addr %s775, 16
        %s777 = scalar_lea.vmem [#allocation10], %s776
        // Predicated region
        $region93: #{tpu_custom_call.1} parent=75 // pred_check
          %p778 = pneg %p189
        $region94: #{tpu_custom_call.1} parent=75 // pred_check_branch
          %780 = sbr.rel (%p778) target = $region96
        $region95: #{tpu_custom_call.1} parent=75 // pred_region
          %781 = dma.done %s774, 256
        $region96: #{tpu_custom_call.1} parent=75 // pred_fallthru
          _
        %s782 = sand.u32 %s52, 1
        %s783 = scalar_lea.sflag [#allocation12], %s782
        %s784 = sand.u32 %s202, 1
        %s785 = smul.addr %s784, 16
        %s786 = scalar_lea.vmem [#allocation11], %s785
        // Predicated region
        $region97: #{tpu_custom_call.1} parent=75 // pred_check
          %p787 = pneg %p215
        $region98: #{tpu_custom_call.1} parent=75 // pred_check_branch
          %789 = sbr.rel (%p787) target = $region100
        $region99: #{tpu_custom_call.1} parent=75 // pred_region
          %790 = dma.done %s783, 256
        $region100: #{tpu_custom_call.1} parent=75 // pred_fallthru
          _
        %s791 = sand.u32 %s52, 1
        %s792 = scalar_lea.sflag [#allocation12], %s791
        %s793 = sand.u32 %s228, 1
        %s794 = scalar_lea.vmem [#allocation13], %s793
        // Predicated region
        $region101: #{tpu_custom_call.1} parent=75 // pred_check
          %p795 = pneg %p241
        $region102: #{tpu_custom_call.1} parent=75 // pred_check_branch
          %797 = sbr.rel (%p795) target = $region104
        $region103: #{tpu_custom_call.1} parent=75 // pred_region
          %798 = dma.done %s792, 16
        $region104: #{tpu_custom_call.1} parent=75 // pred_fallthru
          _
        %s799 = sand.u32 %s52, 1
        %s800 = scalar_lea.sflag [#allocation15], %s799
        %s801 = sand.u32 %s254, 1
        %s802 = scalar_lea.vmem [#allocation14], %s801
        // Predicated region
        $region105: #{tpu_custom_call.1} parent=75 // pred_check
          %p803 = pneg %p267
        $region106: #{tpu_custom_call.1} parent=75 // pred_check_branch
          %805 = sbr.rel (%p803) target = $region108
        $region107: #{tpu_custom_call.1} parent=75 // pred_region
          %806 = dma.done %s800, 16
        $region108: #{tpu_custom_call.1} parent=75 // pred_fallthru
          _
        %s807 = sand.u32 %s52, 1
        %s808 = scalar_lea.sflag [#allocation15], %s807
        %s809 = sand.u32 %s280, 1
        %s810 = smul.addr %s809, 16
        %s811 = scalar_lea.vmem [#allocation16], %s810
        // Predicated region
        $region109: #{tpu_custom_call.1} parent=75 // pred_check
          %p812 = pneg %p293
        $region110: #{tpu_custom_call.1} parent=75 // pred_check_branch
          %814 = sbr.rel (%p812) target = $region112
        $region111: #{tpu_custom_call.1} parent=75 // pred_region
          %815 = dma.done %s808, 256
        $region112: #{tpu_custom_call.1} parent=75 // pred_fallthru
          _
        %s816 = sand.u32 %s52, 1
        %s817 = scalar_lea.sflag [#allocation18], %s816
        %s818 = sand.u32 %s306, 1
        %s819 = scalar_lea.vmem [#allocation17], %s818
        // Predicated region
        $region113: #{tpu_custom_call.1} parent=75 // pred_check
          %p820 = pneg %p319
        $region114: #{tpu_custom_call.1} parent=75 // pred_check_branch
          %822 = sbr.rel (%p820) target = $region116
        $region115: #{tpu_custom_call.1} parent=75 // pred_region
          %823 = dma.done %s817, 16
        $region116: #{tpu_custom_call.1} parent=75 // pred_fallthru
          _
        %s824 = sand.u32 %s52, 1
        %s825 = scalar_lea.sflag [#allocation18], %s824
        %s826 = sand.u32 %s332, 1
        %s827 = smul.addr %s826, 32
        %s828 = scalar_lea.vmem [#allocation19], %s827
        // Predicated region
        $region117: #{tpu_custom_call.1} parent=75 // pred_check
          %p829 = pneg %p345
        $region118: #{tpu_custom_call.1} parent=75 // pred_check_branch
          %831 = sbr.rel (%p829) target = $region120
        $region119: #{tpu_custom_call.1} parent=75 // pred_region
          %832 = dma.done %s825, 512
        $region120: #{tpu_custom_call.1} parent=75 // pred_fallthru
          _
        %s833 = sand.u32 %s52, 1
        %s834 = scalar_lea.sflag [#allocation21], %s833
        %s835 = sand.u32 %s358, 1
        %s836 = scalar_lea.vmem [#allocation20], %s835
        // Predicated region
        $region121: #{tpu_custom_call.1} parent=75 // pred_check
          %p837 = pneg %p371
        $region122: #{tpu_custom_call.1} parent=75 // pred_check_branch
          %839 = sbr.rel (%p837) target = $region124
        $region123: #{tpu_custom_call.1} parent=75 // pred_region
          %840 = dma.done %s834, 16
        $region124: #{tpu_custom_call.1} parent=75 // pred_fallthru
          _
        %s841 = sand.u32 %s52, 1
        %s842 = scalar_lea.sflag [#allocation21], %s841
        %s843 = sand.u32 %s384, 1
        %s844 = scalar_lea.vmem [#allocation22], %s843
        // Predicated region
        $region125: #{tpu_custom_call.1} parent=75 // pred_check
          %p845 = pneg %p397
        $region126: #{tpu_custom_call.1} parent=75 // pred_check_branch
          %847 = sbr.rel (%p845) target = $region128
        $region127: #{tpu_custom_call.1} parent=75 // pred_region
          %848 = dma.done %s842, 16
        $region128: #{tpu_custom_call.1} parent=75 // pred_fallthru
          _
        %s849 = sand.u32 %s410, 1
        %s850 = scalar_lea.sflag [#allocation24], %s849
        %s851 = sand.u32 %s410, 1
        %s852 = scalar_lea.vmem [#allocation23], %s851
        // Predicated region
        $region129: #{tpu_custom_call.1} parent=75 // pred_check
          %p853 = pneg %p423
        $region130: #{tpu_custom_call.1} parent=75 // pred_check_branch
          %855 = sbr.rel (%p853) target = $region132
        $region131: #{tpu_custom_call.1} parent=75 // pred_region
          %856 = dma.done %s850, 16
        $region132: #{tpu_custom_call.1} parent=75 // pred_fallthru
          _
        %s857 = sand.u32 %s72, 1
        %s858 = scalar_lea.sflag [#allocation3], %s857
        %s859 = sand.u32 %s72, 1
        %s860 = smul.addr %s859, 8
        %s861 = scalar_lea.vmem [#allocation2], %s860
        %p862 = pneg %p85
        %p863 = pneg %p82
        %s864 = sand.u32 %s52, 1
        %s865 = scalar_lea.sflag [#allocation6], %s864
        %s866 = sand.u32 %s98, 1
        %s867 = scalar_lea.vmem [#allocation5], %s866
        %p868 = pneg %p111
        %p869 = pneg %p108
        %s870 = sand.u32 %s52, 1
        %s871 = scalar_lea.sflag [#allocation6], %s870
        %s872 = sand.u32 %s124, 1
        %s873 = smul.addr %s872, 16
        %s874 = scalar_lea.vmem [#allocation7], %s873
        %p875 = pneg %p137
        %p876 = pneg %p134
        %s877 = sand.u32 %s52, 1
        %s878 = scalar_lea.sflag [#allocation9], %s877
        %s879 = sand.u32 %s150, 1
        %s880 = smul.addr %s879, 16
        %s881 = scalar_lea.vmem [#allocation8], %s880
        %p882 = pneg %p163
        %p883 = pneg %p160
        %s884 = sand.u32 %s52, 1
        %s885 = scalar_lea.sflag [#allocation9], %s884
        %s886 = sand.u32 %s176, 1
        %s887 = smul.addr %s886, 16
        %s888 = scalar_lea.vmem [#allocation10], %s887
        %p889 = pneg %p189
        %p890 = pneg %p186
        %s891 = sand.u32 %s52, 1
        %s892 = scalar_lea.sflag [#allocation12], %s891
        %s893 = sand.u32 %s202, 1
        %s894 = smul.addr %s893, 16
        %s895 = scalar_lea.vmem [#allocation11], %s894
        %p896 = pneg %p215
        %p897 = pneg %p212
        %s898 = sand.u32 %s52, 1
        %s899 = scalar_lea.sflag [#allocation12], %s898
        %s900 = sand.u32 %s228, 1
        %s901 = scalar_lea.vmem [#allocation13], %s900
        %p902 = pneg %p241
        %p903 = pneg %p238
        %s904 = sand.u32 %s52, 1
        %s905 = scalar_lea.sflag [#allocation15], %s904
        %s906 = sand.u32 %s254, 1
        %s907 = scalar_lea.vmem [#allocation14], %s906
        %p908 = pneg %p267
        %p909 = pneg %p264
        %s910 = sand.u32 %s52, 1
        %s911 = scalar_lea.sflag [#allocation15], %s910
        %s912 = sand.u32 %s280, 1
        %s913 = smul.addr %s912, 16
        %s914 = scalar_lea.vmem [#allocation16], %s913
        %p915 = pneg %p293
        %p916 = pneg %p290
        %s917 = sand.u32 %s52, 1
        %s918 = scalar_lea.sflag [#allocation18], %s917
        %s919 = sand.u32 %s306, 1
        %s920 = scalar_lea.vmem [#allocation17], %s919
        %p921 = pneg %p319
        %p922 = pneg %p316
        %s923 = sand.u32 %s52, 1
        %s924 = scalar_lea.sflag [#allocation18], %s923
        %s925 = sand.u32 %s332, 1
        %s926 = smul.addr %s925, 32
        %s927 = scalar_lea.vmem [#allocation19], %s926
        %p928 = pneg %p345
        %p929 = pneg %p342
        %s930 = sand.u32 %s52, 1
        %s931 = scalar_lea.sflag [#allocation21], %s930
        %s932 = sand.u32 %s358, 1
        %s933 = scalar_lea.vmem [#allocation20], %s932
        %p934 = pneg %p371
        %p935 = pneg %p368
        %s936 = sand.u32 %s52, 1
        %s937 = scalar_lea.sflag [#allocation21], %s936
        %s938 = sand.u32 %s384, 1
        %s939 = scalar_lea.vmem [#allocation22], %s938
        %p940 = pneg %p397
        %p941 = pneg %p394
        %s942 = sand.u32 %s410, 1
        %s943 = scalar_lea.sflag [#allocation24], %s942
        %s944 = sand.u32 %s410, 1
        %s945 = scalar_lea.vmem [#allocation23], %s944
        %p946 = pneg %p423
        %p947 = pneg %p420
        %p948 = pneg %p449
        %p949 = pneg %p446
        %s950 = sand.u32 %s436, 1
        %s951 = scalar_lea.sflag [#allocation4], %s950
        %s952 = sand.u32 %s436, 1
        %s953 = smul.addr %s952, 8
        %s954 = scalar_lea.vmem [#allocation25], %s953
        %p956 = scmp.eq.s32.totalorder %s57, 0
        // Predicated region
        $region133: #{tpu_custom_call.1} parent=75 // pred_check
          %p957 = pneg %p956
        $region134: #{tpu_custom_call.1} parent=75 // pred_check_branch
          %959 = sbr.rel (%p957) target = $region136
        $region135: #{tpu_custom_call.1} parent=75 // pred_region
          %v960 = vld [vmem:[%s742] sm:$0xff]
          %vm961 = vcmask 261120
          %962 = vst.msk [vmem:[%s954] sm:$0xff] %vm961, %v960
        $region136: #{tpu_custom_call.1} parent=75 // pred_fallthru
          _
        %v963 = vld [vmem:[%s954] sm:$0xff]
        %v964 = vpack.c.bf16 %v963, %v963
        %v965 = vld [vmem:[%s759] sm:$0xf]
        %v966 = vld [vmem:[%s759 + $0x4] sm:$0xf]
        %v967 = vld [vmem:[%s759 + $0x8] sm:$0xf]
        %v968 = vld [vmem:[%s759 + $0xc] sm:$0xf]
        %v973 = vunpack.c.l.b16 %v965
        %v974 = vunpack.c.l.b16 %v966
        %v975 = vunpack.c.l.b16 %v967
        %v976 = vunpack.c.l.b16 %v968
        %v977 = vpack.c.b16 %v974, %v973
        %v978 = vpack.c.b16 %v976, %v975
        %vm981 = vcmask 261120
        %v983 = vsel %vm981, %v964, 0
        %985 = vmatprep.subr.bf16.mxu0 0
        %986 = vmatpush1.bf16.msra.mxu0 %v977
        %987 = vmatprep.subr.bf16.mxu0 0
        %988 = vmatpush1.bf16.msra.mxu0 %v978
        %989 = vmatprep.subr.bf16.mxu0 0
        %990 = vmatpush1.bf16.msra.mxu0 0
        %991 = vmatprep.subr.bf16.mxu0 0
        %992 = vmatpush1.bf16.msra.mxu0 0
        %993 = vmatprep.subr.bf16.mxu0 0
        %994 = vmatpush1.bf16.msra.mxu0 0
        %995 = vmatprep.subr.bf16.mxu0 0
        %996 = vmatpush1.bf16.msra.mxu0 0
        %997 = vmatprep.subr.bf16.mxu0 0
        %998 = vmatpush1.bf16.msra.mxu0 0
        %999 = vmatprep.subr.bf16.mxu0 0
        %1000 = vmatpush1.bf16.msra.mxu0 0
        %1001 = vmatprep.subr.bf16.mxu0 0
        %1002 = vmatpush1.bf16.msra.mxu0 0
        %1003 = vmatprep.subr.bf16.mxu0 0
        %1004 = vmatpush1.bf16.msra.mxu0 0
        %1005 = vmatprep.subr.bf16.mxu0 0
        %1006 = vmatpush1.bf16.msra.mxu0 0
        %1007 = vmatprep.subr.bf16.mxu0 0
        %1008 = vmatpush1.bf16.msra.mxu0 0
        %1009 = vmatprep.subr.bf16.mxu0 0
        %1010 = vmatpush1.bf16.msra.mxu0 0
        %1011 = vmatprep.subr.bf16.mxu0 0
        %1012 = vmatpush1.bf16.msra.mxu0 0
        %1013 = vmatprep.subr.bf16.mxu0 0
        %1014 = vmatpush1.bf16.msra.mxu0 0
        %1015 = vmatprep.subr.bf16.mxu0 0
        %1016 = vmatpush1.bf16.msra.mxu0 0
        %1017 = vmatprep.mubr.bf16.mxu0 0
        %1018 = vmatmul.mubr.bf16.gmra.mrb[0].mxu0 %v983
        %v1019 = vpop.f32.mrb[0].mxu0
        %v1020 = vadd.f32 0.0, %v1019
        %v1021 = vpop.f32.mrb[0].mxu0
        %v1022 = vpop.f32.mrb[0].mxu0
        %v1023 = vpop.f32.mrb[0].mxu0
        %1024 = vdwg.mxu0
        %v1025 = vld [vmem:[%s768] sm:$0xf]
        %v1026 = vld [vmem:[%s768 + $0x4] sm:$0xf]
        %v1027 = vld [vmem:[%s768 + $0x8] sm:$0xf]
        %v1028 = vld [vmem:[%s768 + $0xc] sm:$0xf]
        %v1033 = vunpack.c.l.b16 %v1025
        %v1034 = vunpack.c.l.b16 %v1026
        %v1035 = vunpack.c.l.b16 %v1027
        %v1036 = vunpack.c.l.b16 %v1028
        %v1037 = vpack.c.b16 %v1034, %v1033
        %v1038 = vpack.c.b16 %v1036, %v1035
        %1041 = vmatprep.subr.bf16.mxu0 0
        %1042 = vmatpush1.bf16.msra.mxu0 %v1037
        %1043 = vmatprep.subr.bf16.mxu0 0
        %1044 = vmatpush1.bf16.msra.mxu0 %v1038
        %1045 = vmatprep.subr.bf16.mxu0 0
        %1046 = vmatpush1.bf16.msra.mxu0 0
        %1047 = vmatprep.subr.bf16.mxu0 0
        %1048 = vmatpush1.bf16.msra.mxu0 0
        %1049 = vmatprep.subr.bf16.mxu0 0
        %1050 = vmatpush1.bf16.msra.mxu0 0
        %1051 = vmatprep.subr.bf16.mxu0 0
        %1052 = vmatpush1.bf16.msra.mxu0 0
        %1053 = vmatprep.subr.bf16.mxu0 0
        %1054 = vmatpush1.bf16.msra.mxu0 0
        %1055 = vmatprep.subr.bf16.mxu0 0
        %1056 = vmatpush1.bf16.msra.mxu0 0
        %1057 = vmatprep.subr.bf16.mxu0 0
        %1058 = vmatpush1.bf16.msra.mxu0 0
        %1059 = vmatprep.subr.bf16.mxu0 0
        %1060 = vmatpush1.bf16.msra.mxu0 0
        %1061 = vmatprep.subr.bf16.mxu0 0
        %1062 = vmatpush1.bf16.msra.mxu0 0
        %1063 = vmatprep.subr.bf16.mxu0 0
        %1064 = vmatpush1.bf16.msra.mxu0 0
        %1065 = vmatprep.subr.bf16.mxu0 0
        %1066 = vmatpush1.bf16.msra.mxu0 0
        %1067 = vmatprep.subr.bf16.mxu0 0
        %1068 = vmatpush1.bf16.msra.mxu0 0
        %1069 = vmatprep.subr.bf16.mxu0 0
        %1070 = vmatpush1.bf16.msra.mxu0 0
        %1071 = vmatprep.subr.bf16.mxu0 0
        %1072 = vmatpush1.bf16.msra.mxu0 0
        %1073 = vmatprep.mubr.bf16.mxu0 0
        %1074 = vmatmul.mubr.bf16.gmra.mrb[0].mxu0 %v983
        %v1075 = vpop.f32.mrb[0].mxu0
        %v1076 = vadd.f32 0.0, %v1075
        %v1077 = vpop.f32.mrb[0].mxu0
        %v1078 = vpop.f32.mrb[0].mxu0
        %v1079 = vpop.f32.mrb[0].mxu0
        %1080 = vdwg.mxu0
        %v1081 = vld [vmem:[%s777] sm:$0xf]
        %v1082 = vld [vmem:[%s777 + $0x4] sm:$0xf]
        %v1083 = vld [vmem:[%s777 + $0x8] sm:$0xf]
        %v1084 = vld [vmem:[%s777 + $0xc] sm:$0xf]
        %v1089 = vunpack.c.l.b16 %v1081
        %v1090 = vunpack.c.l.b16 %v1082
        %v1091 = vunpack.c.l.b16 %v1083
        %v1092 = vunpack.c.l.b16 %v1084
        %v1093 = vpack.c.b16 %v1090, %v1089
        %v1094 = vpack.c.b16 %v1092, %v1091
        %1097 = vmatprep.subr.bf16.mxu0 0
        %1098 = vmatpush1.bf16.msra.mxu0 %v1093
        %1099 = vmatprep.subr.bf16.mxu0 0
        %1100 = vmatpush1.bf16.msra.mxu0 %v1094
        %1101 = vmatprep.subr.bf16.mxu0 0
        %1102 = vmatpush1.bf16.msra.mxu0 0
        %1103 = vmatprep.subr.bf16.mxu0 0
        %1104 = vmatpush1.bf16.msra.mxu0 0
        %1105 = vmatprep.subr.bf16.mxu0 0
        %1106 = vmatpush1.bf16.msra.mxu0 0
        %1107 = vmatprep.subr.bf16.mxu0 0
        %1108 = vmatpush1.bf16.msra.mxu0 0
        %1109 = vmatprep.subr.bf16.mxu0 0
        %1110 = vmatpush1.bf16.msra.mxu0 0
        %1111 = vmatprep.subr.bf16.mxu0 0
        %1112 = vmatpush1.bf16.msra.mxu0 0
        %1113 = vmatprep.subr.bf16.mxu0 0
        %1114 = vmatpush1.bf16.msra.mxu0 0
        %1115 = vmatprep.subr.bf16.mxu0 0
        %1116 = vmatpush1.bf16.msra.mxu0 0
        %1117 = vmatprep.subr.bf16.mxu0 0
        %1118 = vmatpush1.bf16.msra.mxu0 0
        %1119 = vmatprep.subr.bf16.mxu0 0
        %1120 = vmatpush1.bf16.msra.mxu0 0
        %1121 = vmatprep.subr.bf16.mxu0 0
        %1122 = vmatpush1.bf16.msra.mxu0 0
        %1123 = vmatprep.subr.bf16.mxu0 0
        %1124 = vmatpush1.bf16.msra.mxu0 0
        %1125 = vmatprep.subr.bf16.mxu0 0
        %1126 = vmatpush1.bf16.msra.mxu0 0
        %1127 = vmatprep.subr.bf16.mxu0 0
        %1128 = vmatpush1.bf16.msra.mxu0 0
        %1129 = vmatprep.mubr.bf16.mxu0 0
        %1130 = vmatmul.mubr.bf16.gmra.mrb[0].mxu0 %v983
        %v1131 = vpop.f32.mrb[0].mxu0
        %v1132 = vadd.f32 0.0, %v1131
        %v1133 = vpop.f32.mrb[0].mxu0
        %v1134 = vpop.f32.mrb[0].mxu0
        %v1135 = vpop.f32.mrb[0].mxu0
        %1136 = vdwg.mxu0
        %v1137 = vmul.f32 %v1020, 0.35355338
        %v1138 = vpack.c.bf16 %v1137, %v1137
        %v1139 = vpack.c.bf16 %v1076, %v1076
        %v1140 = vpack.c.bf16 %v1132, %v1132
        %v1141 = vlaneseq
        %v1142 = vand.u32 %v1141, 127
        %v1143 = vld [vmem:[%s750] sm:$0x1]
        %1144 = vset.pattern.permute.xlu0 0
        %1145 = vperm.xlu0 %1144, %v1143
        %v1146 = vpop.permute.xlu0 %1145
        %v1147 = vlaneseq
        %v1148 = vshrl.u32 %v1147, 7
        %v1149 = vsub.s32 0, %v1148
        %v1150 = vrot.slane %v1146, %v1149
        %vm1151 = vcmp.lt.s32.totalorder %v1142, %v1150
        %vm1152 = vcmask 64512
        %v1154 = vsel %vm1152, %v1138, 0
        %v1157 = vsel %vm1152, %v1139, 0
        %1159 = vmatprep.subr.bf16.mxu0 0
        %1160 = vmatpush1.bf16.xpose.msra.mxu0 %v1157
        %1161 = vmatprep.subr.bf16.mxu0 0
        %1162 = vmatpush1.bf16.xpose.msra.mxu0 0
        %1163 = vmatprep.subr.bf16.mxu0 0
        %1164 = vmatpush1.bf16.xpose.msra.mxu0 0
        %1165 = vmatprep.subr.bf16.mxu0 0
        %1166 = vmatpush1.bf16.xpose.msra.mxu0 0
        %1167 = vmatprep.subr.bf16.mxu0 0
        %1168 = vmatpush1.bf16.xpose.msra.mxu0 0
        %1169 = vmatprep.subr.bf16.mxu0 0
        %1170 = vmatpush1.bf16.xpose.msra.mxu0 0
        %1171 = vmatprep.subr.bf16.mxu0 0
        %1172 = vmatpush1.bf16.xpose.msra.mxu0 0
        %1173 = vmatprep.subr.bf16.mxu0 0
        %1174 = vmatpush1.bf16.xpose.msra.mxu0 0
        %1175 = vmatprep.subr.bf16.mxu0 0
        %1176 = vmatpush1.bf16.xpose.msra.mxu0 0
        %1177 = vmatprep.subr.bf16.mxu0 0
        %1178 = vmatpush1.bf16.xpose.msra.mxu0 0
        %1179 = vmatprep.subr.bf16.mxu0 0
        %1180 = vmatpush1.bf16.xpose.msra.mxu0 0
        %1181 = vmatprep.subr.bf16.mxu0 0
        %1182 = vmatpush1.bf16.xpose.msra.mxu0 0
        %1183 = vmatprep.subr.bf16.mxu0 0
        %1184 = vmatpush1.bf16.xpose.msra.mxu0 0
        %1185 = vmatprep.subr.bf16.mxu0 0
        %1186 = vmatpush1.bf16.xpose.msra.mxu0 0
        %1187 = vmatprep.subr.bf16.mxu0 0
        %1188 = vmatpush1.bf16.xpose.msra.mxu0 0
        %1189 = vmatprep.subr.bf16.mxu0 0
        %1190 = vmatpush1.bf16.xpose.msra.mxu0 0
        %1191 = vmatprep.mubr.bf16.mxu0 0
        %1192 = vmatmul.mubr.bf16.gmra.mrb[0].mxu0 %v1154
        %v1193 = vpop.f32.mrb[0].mxu0
        %v1194 = vadd.f32 0.0, %v1193
        %v1195 = vpop.f32.mrb[0].mxu0
        %v1196 = vpop.f32.mrb[0].mxu0
        %v1197 = vpop.f32.mrb[0].mxu0
        %1198 = vdwg.mxu0
        %v1199 = vsel %vm1151, 1, 0
        %vm1200 = vcmp.eq.s32.totalorder %v1199, 1
        %v1201 = vsel %vm1200, %v1194, -1000000.0
        %v1202 = vsel %vm1152, %v1201, -inf
        %1203 = vmax.xlane.f32.xlu0 %v1202
        %v1204 = vpop.xlane.xlu0 %1203
        %v1205 = vsub.f32 %v1201, %v1204
        %v1206 = vmul.f32 %v1205, 1.442695
        %v1207 = vpow.pop %v1206
        %v1208 = vsel %vm1152, %v1207, 0.0
        %1209 = vadd.xlane.f32.xlu0 %v1208
        %v1210 = vpop.xlane.xlu0 %1209
        %v1211 = vrcp.pop %v1210
        %v1212 = vmul.f32 %v1207, %v1211
        %v1213 = vpack.c.bf16 %v1212, %v1212
        %v1215 = vsel %vm1152, %v1213, 0
        %vm1217 = vcmask 1043456
        %v1219 = vsel %vm1217, %v1140, 0
        %1221 = vmatprep.subr.bf16.mxu0 0
        %1222 = vmatpush1.bf16.msra.mxu0 %v1219
        %1223 = vmatprep.subr.bf16.mxu0 0
        %1224 = vmatpush1.bf16.msra.mxu0 0
        %1225 = vmatprep.subr.bf16.mxu0 0
        %1226 = vmatpush1.bf16.msra.mxu0 0
        %1227 = vmatprep.subr.bf16.mxu0 0
        %1228 = vmatpush1.bf16.msra.mxu0 0
        %1229 = vmatprep.subr.bf16.mxu0 0
        %1230 = vmatpush1.bf16.msra.mxu0 0
        %1231 = vmatprep.subr.bf16.mxu0 0
        %1232 = vmatpush1.bf16.msra.mxu0 0
        %1233 = vmatprep.subr.bf16.mxu0 0
        %1234 = vmatpush1.bf16.msra.mxu0 0
        %1235 = vmatprep.subr.bf16.mxu0 0
        %1236 = vmatpush1.bf16.msra.mxu0 0
        %1237 = vmatprep.subr.bf16.mxu0 0
        %1238 = vmatpush1.bf16.msra.mxu0 0
        %1239 = vmatprep.subr.bf16.mxu0 0
        %1240 = vmatpush1.bf16.msra.mxu0 0
        %1241 = vmatprep.subr.bf16.mxu0 0
        %1242 = vmatpush1.bf16.msra.mxu0 0
        %1243 = vmatprep.subr.bf16.mxu0 0
        %1244 = vmatpush1.bf16.msra.mxu0 0
        %1245 = vmatprep.subr.bf16.mxu0 0
        %1246 = vmatpush1.bf16.msra.mxu0 0
        %1247 = vmatprep.subr.bf16.mxu0 0
        %1248 = vmatpush1.bf16.msra.mxu0 0
        %1249 = vmatprep.subr.bf16.mxu0 0
        %1250 = vmatpush1.bf16.msra.mxu0 0
        %1251 = vmatprep.subr.bf16.mxu0 0
        %1252 = vmatpush1.bf16.msra.mxu0 0
        %1253 = vmatprep.mubr.bf16.mxu0 0
        %1254 = vmatmul.mubr.bf16.gmra.mrb[0].mxu0 %v1215
        %v1255 = vpop.f32.mrb[0].mxu0
        %v1256 = vadd.f32 0.0, %v1255
        %v1257 = vpop.f32.mrb[0].mxu0
        %v1258 = vpop.f32.mrb[0].mxu0
        %v1259 = vpop.f32.mrb[0].mxu0
        %1260 = vdwg.mxu0
        %v1261 = vpack.c.bf16 %v1256, %v1256
        %1263 = vrot.lane.b32.xlu0 %v1138, 120
        %v1264 = vpop.permute.xlu0 %1263
        %1266 = vrot.lane.b32.xlu0 %v1139, 120
        %v1267 = vpop.permute.xlu0 %1266
        %v1269 = vsel %vm1152, %v1264, 0
        %v1272 = vsel %vm1152, %v1267, 0
        %1274 = vmatprep.subr.bf16.mxu0 0
        %1275 = vmatpush1.bf16.xpose.msra.mxu0 %v1272
        %1276 = vmatprep.subr.bf16.mxu0 0
        %1277 = vmatpush1.bf16.xpose.msra.mxu0 0
        %1278 = vmatprep.subr.bf16.mxu0 0
        %1279 = vmatpush1.bf16.xpose.msra.mxu0 0
        %1280 = vmatprep.subr.bf16.mxu0 0
        %1281 = vmatpush1.bf16.xpose.msra.mxu0 0
        %1282 = vmatprep.subr.bf16.mxu0 0
        %1283 = vmatpush1.bf16.xpose.msra.mxu0 0
        %1284 = vmatprep.subr.bf16.mxu0 0
        %1285 = vmatpush1.bf16.xpose.msra.mxu0 0
        %1286 = vmatprep.subr.bf16.mxu0 0
        %1287 = vmatpush1.bf16.xpose.msra.mxu0 0
        %1288 = vmatprep.subr.bf16.mxu0 0
        %1289 = vmatpush1.bf16.xpose.msra.mxu0 0
        %1290 = vmatprep.subr.bf16.mxu0 0
        %1291 = vmatpush1.bf16.xpose.msra.mxu0 0
        %1292 = vmatprep.subr.bf16.mxu0 0
        %1293 = vmatpush1.bf16.xpose.msra.mxu0 0
        %1294 = vmatprep.subr.bf16.mxu0 0
        %1295 = vmatpush1.bf16.xpose.msra.mxu0 0
        %1296 = vmatprep.subr.bf16.mxu0 0
        %1297 = vmatpush1.bf16.xpose.msra.mxu0 0
        %1298 = vmatprep.subr.bf16.mxu0 0
        %1299 = vmatpush1.bf16.xpose.msra.mxu0 0
        %1300 = vmatprep.subr.bf16.mxu0 0
        %1301 = vmatpush1.bf16.xpose.msra.mxu0 0
        %1302 = vmatprep.subr.bf16.mxu0 0
        %1303 = vmatpush1.bf16.xpose.msra.mxu0 0
        %1304 = vmatprep.subr.bf16.mxu0 0
        %1305 = vmatpush1.bf16.xpose.msra.mxu0 0
        %1306 = vmatprep.mubr.bf16.mxu0 0
        %1307 = vmatmul.mubr.bf16.gmra.mrb[0].mxu0 %v1269
        %v1308 = vpop.f32.mrb[0].mxu0
        %v1309 = vadd.f32 0.0, %v1308
        %v1310 = vpop.f32.mrb[0].mxu0
        %v1311 = vpop.f32.mrb[0].mxu0
        %v1312 = vpop.f32.mrb[0].mxu0
        %1313 = vdwg.mxu0
        %v1314 = vsel %vm1200, %v1309, -1000000.0
        %v1315 = vsel %vm1152, %v1314, -inf
        %1316 = vmax.xlane.f32.xlu0 %v1315
        %v1317 = vpop.xlane.xlu0 %1316
        %v1318 = vsub.f32 %v1314, %v1317
        %v1319 = vmul.f32 %v1318, 1.442695
        %v1320 = vpow.pop %v1319
        %v1321 = vsel %vm1152, %v1320, 0.0
        %1322 = vadd.xlane.f32.xlu0 %v1321
        %v1323 = vpop.xlane.xlu0 %1322
        %v1324 = vrcp.pop %v1323
        %v1325 = vmul.f32 %v1320, %v1324
        %v1326 = vpack.c.bf16 %v1325, %v1325
        %1328 = vrot.lane.b32.xlu0 %v1140, 120
        %v1329 = vpop.permute.xlu0 %1328
        %v1331 = vsel %vm1152, %v1326, 0
        %v1334 = vsel %vm1217, %v1329, 0
        %1336 = vmatprep.subr.bf16.mxu0 0
        %1337 = vmatpush1.bf16.msra.mxu0 %v1334
        %1338 = vmatprep.subr.bf16.mxu0 0
        %1339 = vmatpush1.bf16.msra.mxu0 0
        %1340 = vmatprep.subr.bf16.mxu0 0
        %1341 = vmatpush1.bf16.msra.mxu0 0
        %1342 = vmatprep.subr.bf16.mxu0 0
        %1343 = vmatpush1.bf16.msra.mxu0 0
        %1344 = vmatprep.subr.bf16.mxu0 0
        %1345 = vmatpush1.bf16.msra.mxu0 0
        %1346 = vmatprep.subr.bf16.mxu0 0
        %1347 = vmatpush1.bf16.msra.mxu0 0
        %1348 = vmatprep.subr.bf16.mxu0 0
        %1349 = vmatpush1.bf16.msra.mxu0 0
        %1350 = vmatprep.subr.bf16.mxu0 0
        %1351 = vmatpush1.bf16.msra.mxu0 0
        %1352 = vmatprep.subr.bf16.mxu0 0
        %1353 = vmatpush1.bf16.msra.mxu0 0
        %1354 = vmatprep.subr.bf16.mxu0 0
        %1355 = vmatpush1.bf16.msra.mxu0 0
        %1356 = vmatprep.subr.bf16.mxu0 0
        %1357 = vmatpush1.bf16.msra.mxu0 0
        %1358 = vmatprep.subr.bf16.mxu0 0
        %1359 = vmatpush1.bf16.msra.mxu0 0
        %1360 = vmatprep.subr.bf16.mxu0 0
        %1361 = vmatpush1.bf16.msra.mxu0 0
        %1362 = vmatprep.subr.bf16.mxu0 0
        %1363 = vmatpush1.bf16.msra.mxu0 0
        %1364 = vmatprep.subr.bf16.mxu0 0
        %1365 = vmatpush1.bf16.msra.mxu0 0
        %1366 = vmatprep.subr.bf16.mxu0 0
        %1367 = vmatpush1.bf16.msra.mxu0 0
        %1368 = vmatprep.mubr.bf16.mxu0 0
        %1369 = vmatmul.mubr.bf16.gmra.mrb[0].mxu0 %v1331
        %v1370 = vpop.f32.mrb[0].mxu0
        %v1371 = vadd.f32 0.0, %v1370
        %v1372 = vpop.f32.mrb[0].mxu0
        %v1373 = vpop.f32.mrb[0].mxu0
        %v1374 = vpop.f32.mrb[0].mxu0
        %1375 = vdwg.mxu0
        %v1376 = vpack.c.bf16 %v1371, %v1371
        %1377 = vrot.lane.b32.xlu0 %v1138, 112
        %v1378 = vpop.permute.xlu0 %1377
        %1379 = vrot.lane.b32.xlu0 %v1139, 112
        %v1380 = vpop.permute.xlu0 %1379
        %v1382 = vsel %vm1152, %v1378, 0
        %v1385 = vsel %vm1152, %v1380, 0
        %1387 = vmatprep.subr.bf16.mxu0 0
        %1388 = vmatpush1.bf16.xpose.msra.mxu0 %v1385
        %1389 = vmatprep.subr.bf16.mxu0 0
        %1390 = vmatpush1.bf16.xpose.msra.mxu0 0
        %1391 = vmatprep.subr.bf16.mxu0 0
        %1392 = vmatpush1.bf16.xpose.msra.mxu0 0
        %1393 = vmatprep.subr.bf16.mxu0 0
        %1394 = vmatpush1.bf16.xpose.msra.mxu0 0
        %1395 = vmatprep.subr.bf16.mxu0 0
        %1396 = vmatpush1.bf16.xpose.msra.mxu0 0
        %1397 = vmatprep.subr.bf16.mxu0 0
        %1398 = vmatpush1.bf16.xpose.msra.mxu0 0
        %1399 = vmatprep.subr.bf16.mxu0 0
        %1400 = vmatpush1.bf16.xpose.msra.mxu0 0
        %1401 = vmatprep.subr.bf16.mxu0 0
        %1402 = vmatpush1.bf16.xpose.msra.mxu0 0
        %1403 = vmatprep.subr.bf16.mxu0 0
        %1404 = vmatpush1.bf16.xpose.msra.mxu0 0
        %1405 = vmatprep.subr.bf16.mxu0 0
        %1406 = vmatpush1.bf16.xpose.msra.mxu0 0
        %1407 = vmatprep.subr.bf16.mxu0 0
        %1408 = vmatpush1.bf16.xpose.msra.mxu0 0
        %1409 = vmatprep.subr.bf16.mxu0 0
        %1410 = vmatpush1.bf16.xpose.msra.mxu0 0
        %1411 = vmatprep.subr.bf16.mxu0 0
        %1412 = vmatpush1.bf16.xpose.msra.mxu0 0
        %1413 = vmatprep.subr.bf16.mxu0 0
        %1414 = vmatpush1.bf16.xpose.msra.mxu0 0
        %1415 = vmatprep.subr.bf16.mxu0 0
        %1416 = vmatpush1.bf16.xpose.msra.mxu0 0
        %1417 = vmatprep.subr.bf16.mxu0 0
        %1418 = vmatpush1.bf16.xpose.msra.mxu0 0
        %1419 = vmatprep.mubr.bf16.mxu0 0
        %1420 = vmatmul.mubr.bf16.gmra.mrb[0].mxu0 %v1382
        %v1421 = vpop.f32.mrb[0].mxu0
        %v1422 = vadd.f32 0.0, %v1421
        %v1423 = vpop.f32.mrb[0].mxu0
        %v1424 = vpop.f32.mrb[0].mxu0
        %v1425 = vpop.f32.mrb[0].mxu0
        %1426 = vdwg.mxu0
        %v1427 = vsel %vm1200, %v1422, -1000000.0
        %v1428 = vsel %vm1152, %v1427, -inf
        %1429 = vmax.xlane.f32.xlu0 %v1428
        %v1430 = vpop.xlane.xlu0 %1429
        %v1431 = vsub.f32 %v1427, %v1430
        %v1432 = vmul.f32 %v1431, 1.442695
        %v1433 = vpow.pop %v1432
        %v1434 = vsel %vm1152, %v1433, 0.0
        %1435 = vadd.xlane.f32.xlu0 %v1434
        %v1436 = vpop.xlane.xlu0 %1435
        %v1437 = vrcp.pop %v1436
        %v1438 = vmul.f32 %v1433, %v1437
        %v1439 = vpack.c.bf16 %v1438, %v1438
        %1440 = vrot.lane.b32.xlu0 %v1140, 112
        %v1441 = vpop.permute.xlu0 %1440
        %v1443 = vsel %vm1152, %v1439, 0
        %v1446 = vsel %vm1217, %v1441, 0
        %1448 = vmatprep.subr.bf16.mxu0 0
        %1449 = vmatpush1.bf16.msra.mxu0 %v1446
        %1450 = vmatprep.subr.bf16.mxu0 0
        %1451 = vmatpush1.bf16.msra.mxu0 0
        %1452 = vmatprep.subr.bf16.mxu0 0
        %1453 = vmatpush1.bf16.msra.mxu0 0
        %1454 = vmatprep.subr.bf16.mxu0 0
        %1455 = vmatpush1.bf16.msra.mxu0 0
        %1456 = vmatprep.subr.bf16.mxu0 0
        %1457 = vmatpush1.bf16.msra.mxu0 0
        %1458 = vmatprep.subr.bf16.mxu0 0
        %1459 = vmatpush1.bf16.msra.mxu0 0
        %1460 = vmatprep.subr.bf16.mxu0 0
        %1461 = vmatpush1.bf16.msra.mxu0 0
        %1462 = vmatprep.subr.bf16.mxu0 0
        %1463 = vmatpush1.bf16.msra.mxu0 0
        %1464 = vmatprep.subr.bf16.mxu0 0
        %1465 = vmatpush1.bf16.msra.mxu0 0
        %1466 = vmatprep.subr.bf16.mxu0 0
        %1467 = vmatpush1.bf16.msra.mxu0 0
        %1468 = vmatprep.subr.bf16.mxu0 0
        %1469 = vmatpush1.bf16.msra.mxu0 0
        %1470 = vmatprep.subr.bf16.mxu0 0
        %1471 = vmatpush1.bf16.msra.mxu0 0
        %1472 = vmatprep.subr.bf16.mxu0 0
        %1473 = vmatpush1.bf16.msra.mxu0 0
        %1474 = vmatprep.subr.bf16.mxu0 0
        %1475 = vmatpush1.bf16.msra.mxu0 0
        %1476 = vmatprep.subr.bf16.mxu0 0
        %1477 = vmatpush1.bf16.msra.mxu0 0
        %1478 = vmatprep.subr.bf16.mxu0 0
        %1479 = vmatpush1.bf16.msra.mxu0 0
        %1480 = vmatprep.mubr.bf16.mxu0 0
        %1481 = vmatmul.mubr.bf16.gmra.mrb[0].mxu0 %v1443
        %v1482 = vpop.f32.mrb[0].mxu0
        %v1483 = vadd.f32 0.0, %v1482
        %v1484 = vpop.f32.mrb[0].mxu0
        %v1485 = vpop.f32.mrb[0].mxu0
        %v1486 = vpop.f32.mrb[0].mxu0
        %1487 = vdwg.mxu0
        %v1488 = vpack.c.bf16 %v1483, %v1483
        %1489 = vrot.lane.b32.xlu0 %v1138, 104
        %v1490 = vpop.permute.xlu0 %1489
        %1491 = vrot.lane.b32.xlu0 %v1139, 104
        %v1492 = vpop.permute.xlu0 %1491
        %v1494 = vsel %vm1152, %v1490, 0
        %v1497 = vsel %vm1152, %v1492, 0
        %1499 = vmatprep.subr.bf16.mxu0 0
        %1500 = vmatpush1.bf16.xpose.msra.mxu0 %v1497
        %1501 = vmatprep.subr.bf16.mxu0 0
        %1502 = vmatpush1.bf16.xpose.msra.mxu0 0
        %1503 = vmatprep.subr.bf16.mxu0 0
        %1504 = vmatpush1.bf16.xpose.msra.mxu0 0
        %1505 = vmatprep.subr.bf16.mxu0 0
        %1506 = vmatpush1.bf16.xpose.msra.mxu0 0
        %1507 = vmatprep.subr.bf16.mxu0 0
        %1508 = vmatpush1.bf16.xpose.msra.mxu0 0
        %1509 = vmatprep.subr.bf16.mxu0 0
        %1510 = vmatpush1.bf16.xpose.msra.mxu0 0
        %1511 = vmatprep.subr.bf16.mxu0 0
        %1512 = vmatpush1.bf16.xpose.msra.mxu0 0
        %1513 = vmatprep.subr.bf16.mxu0 0
        %1514 = vmatpush1.bf16.xpose.msra.mxu0 0
        %1515 = vmatprep.subr.bf16.mxu0 0
        %1516 = vmatpush1.bf16.xpose.msra.mxu0 0
        %1517 = vmatprep.subr.bf16.mxu0 0
        %1518 = vmatpush1.bf16.xpose.msra.mxu0 0
        %1519 = vmatprep.subr.bf16.mxu0 0
        %1520 = vmatpush1.bf16.xpose.msra.mxu0 0
        %1521 = vmatprep.subr.bf16.mxu0 0
        %1522 = vmatpush1.bf16.xpose.msra.mxu0 0
        %1523 = vmatprep.subr.bf16.mxu0 0
        %1524 = vmatpush1.bf16.xpose.msra.mxu0 0
        %1525 = vmatprep.subr.bf16.mxu0 0
        %1526 = vmatpush1.bf16.xpose.msra.mxu0 0
        %1527 = vmatprep.subr.bf16.mxu0 0
        %1528 = vmatpush1.bf16.xpose.msra.mxu0 0
        %1529 = vmatprep.subr.bf16.mxu0 0
        %1530 = vmatpush1.bf16.xpose.msra.mxu0 0
        %1531 = vmatprep.mubr.bf16.mxu0 0
        %1532 = vmatmul.mubr.bf16.gmra.mrb[0].mxu0 %v1494
        %v1533 = vpop.f32.mrb[0].mxu0
        %v1534 = vadd.f32 0.0, %v1533
        %v1535 = vpop.f32.mrb[0].mxu0
        %v1536 = vpop.f32.mrb[0].mxu0
        %v1537 = vpop.f32.mrb[0].mxu0
        %1538 = vdwg.mxu0
        %v1539 = vsel %vm1200, %v1534, -1000000.0
        %v1540 = vsel %vm1152, %v1539, -inf
        %1541 = vmax.xlane.f32.xlu0 %v1540
        %v1542 = vpop.xlane.xlu0 %1541
        %v1543 = vsub.f32 %v1539, %v1542
        %v1544 = vmul.f32 %v1543, 1.442695
        %v1545 = vpow.pop %v1544
        %v1546 = vsel %vm1152, %v1545, 0.0
        %1547 = vadd.xlane.f32.xlu0 %v1546
        %v1548 = vpop.xlane.xlu0 %1547
        %v1549 = vrcp.pop %v1548
        %v1550 = vmul.f32 %v1545, %v1549
        %v1551 = vpack.c.bf16 %v1550, %v1550
        %1552 = vrot.lane.b32.xlu0 %v1140, 104
        %v1553 = vpop.permute.xlu0 %1552
        %v1555 = vsel %vm1152, %v1551, 0
        %v1558 = vsel %vm1217, %v1553, 0
        %1560 = vmatprep.subr.bf16.mxu0 0
        %1561 = vmatpush1.bf16.msra.mxu0 %v1558
        %1562 = vmatprep.subr.bf16.mxu0 0
        %1563 = vmatpush1.bf16.msra.mxu0 0
        %1564 = vmatprep.subr.bf16.mxu0 0
        %1565 = vmatpush1.bf16.msra.mxu0 0
        %1566 = vmatprep.subr.bf16.mxu0 0
        %1567 = vmatpush1.bf16.msra.mxu0 0
        %1568 = vmatprep.subr.bf16.mxu0 0
        %1569 = vmatpush1.bf16.msra.mxu0 0
        %1570 = vmatprep.subr.bf16.mxu0 0
        %1571 = vmatpush1.bf16.msra.mxu0 0
        %1572 = vmatprep.subr.bf16.mxu0 0
        %1573 = vmatpush1.bf16.msra.mxu0 0
        %1574 = vmatprep.subr.bf16.mxu0 0
        %1575 = vmatpush1.bf16.msra.mxu0 0
        %1576 = vmatprep.subr.bf16.mxu0 0
        %1577 = vmatpush1.bf16.msra.mxu0 0
        %1578 = vmatprep.subr.bf16.mxu0 0
        %1579 = vmatpush1.bf16.msra.mxu0 0
        %1580 = vmatprep.subr.bf16.mxu0 0
        %1581 = vmatpush1.bf16.msra.mxu0 0
        %1582 = vmatprep.subr.bf16.mxu0 0
        %1583 = vmatpush1.bf16.msra.mxu0 0
        %1584 = vmatprep.subr.bf16.mxu0 0
        %1585 = vmatpush1.bf16.msra.mxu0 0
        %1586 = vmatprep.subr.bf16.mxu0 0
        %1587 = vmatpush1.bf16.msra.mxu0 0
        %1588 = vmatprep.subr.bf16.mxu0 0
        %1589 = vmatpush1.bf16.msra.mxu0 0
        %1590 = vmatprep.subr.bf16.mxu0 0
        %1591 = vmatpush1.bf16.msra.mxu0 0
        %1592 = vmatprep.mubr.bf16.mxu0 0
        %1593 = vmatmul.mubr.bf16.gmra.mrb[0].mxu0 %v1555
        %v1594 = vpop.f32.mrb[0].mxu0
        %v1595 = vadd.f32 0.0, %v1594
        %v1596 = vpop.f32.mrb[0].mxu0
        %v1597 = vpop.f32.mrb[0].mxu0
        %v1598 = vpop.f32.mrb[0].mxu0
        %1599 = vdwg.mxu0
        %v1600 = vpack.c.bf16 %v1595, %v1595
        %1602 = vrot.lane.b32.xlu0 %v1376, 8
        %v1603 = vpop.permute.xlu0 %1602
        %1605 = vrot.lane.b32.xlu0 %v1488, 16
        %v1606 = vpop.permute.xlu0 %1605
        %1608 = vrot.lane.b32.xlu0 %v1600, 24
        %v1609 = vpop.permute.xlu0 %1608
        %v1612 = vsel %vm1152, %v1261, %v1603
        %vm1613 = vcmask 130048
        %v1615 = vsel %vm1613, %v1612, %v1606
        %vm1616 = vcmask 195584
        %v1618 = vsel %vm1616, %v1615, %v1609
        %v1619 = vld [vmem:[%s786] sm:$0xf]
        %v1620 = vld [vmem:[%s786 + $0x4] sm:$0xf]
        %v1621 = vld [vmem:[%s786 + $0x8] sm:$0xf]
        %v1622 = vld [vmem:[%s786 + $0xc] sm:$0xf]
        %v1627 = vunpack.c.l.b16 %v1619
        %v1628 = vunpack.c.l.b16 %v1620
        %v1629 = vunpack.c.l.b16 %v1621
        %v1630 = vunpack.c.l.b16 %v1622
        %v1631 = vpack.c.b16 %v1628, %v1627
        %v1632 = vpack.c.b16 %v1630, %v1629
        %v1635 = vsel %vm981, %v1618, 0
        %1637 = vmatprep.subr.bf16.mxu0 0
        %1638 = vmatpush1.bf16.msra.mxu0 %v1631
        %1639 = vmatprep.subr.bf16.mxu0 0
        %1640 = vmatpush1.bf16.msra.mxu0 %v1632
        %1641 = vmatprep.subr.bf16.mxu0 0
        %1642 = vmatpush1.bf16.msra.mxu0 0
        %1643 = vmatprep.subr.bf16.mxu0 0
        %1644 = vmatpush1.bf16.msra.mxu0 0
        %1645 = vmatprep.subr.bf16.mxu0 0
        %1646 = vmatpush1.bf16.msra.mxu0 0
        %1647 = vmatprep.subr.bf16.mxu0 0
        %1648 = vmatpush1.bf16.msra.mxu0 0
        %1649 = vmatprep.subr.bf16.mxu0 0
        %1650 = vmatpush1.bf16.msra.mxu0 0
        %1651 = vmatprep.subr.bf16.mxu0 0
        %1652 = vmatpush1.bf16.msra.mxu0 0
        %1653 = vmatprep.subr.bf16.mxu0 0
        %1654 = vmatpush1.bf16.msra.mxu0 0
        %1655 = vmatprep.subr.bf16.mxu0 0
        %1656 = vmatpush1.bf16.msra.mxu0 0
        %1657 = vmatprep.subr.bf16.mxu0 0
        %1658 = vmatpush1.bf16.msra.mxu0 0
        %1659 = vmatprep.subr.bf16.mxu0 0
        %1660 = vmatpush1.bf16.msra.mxu0 0
        %1661 = vmatprep.subr.bf16.mxu0 0
        %1662 = vmatpush1.bf16.msra.mxu0 0
        %1663 = vmatprep.subr.bf16.mxu0 0
        %1664 = vmatpush1.bf16.msra.mxu0 0
        %1665 = vmatprep.subr.bf16.mxu0 0
        %1666 = vmatpush1.bf16.msra.mxu0 0
        %1667 = vmatprep.subr.bf16.mxu0 0
        %1668 = vmatpush1.bf16.msra.mxu0 0
        %1669 = vmatprep.mubr.bf16.mxu0 0
        %1670 = vmatmul.mubr.bf16.gmra.mrb[0].mxu0 %v1635
        %v1671 = vpop.f32.mrb[0].mxu0
        %v1672 = vadd.f32 %v963, %v1671
        %v1673 = vpop.f32.mrb[0].mxu0
        %v1674 = vpop.f32.mrb[0].mxu0
        %v1675 = vpop.f32.mrb[0].mxu0
        %1676 = vdwg.mxu0
        %v1677 = vld [vmem:[%s794] sm:$0x1]
        %v1678 = vld [vmem:[%s802] sm:$0x1]
        %v1679 = vsel %vm981, %v1672, 0.0
        %1680 = vadd.xlane.f32.xlu0 %v1679
        %v1681 = vpop.xlane.xlu0 %1680
        %v1682 = vrcp.pop 32.0
        %v1683 = vmul.f32 %v1681, %v1682
        %v1684 = vsub.f32 %v1672, %v1683
        %v1685 = vmul.f32 %v1684, %v1684
        %v1686 = vsel %vm981, %v1685, 0.0
        %1687 = vadd.xlane.f32.xlu0 %v1686
        %v1688 = vpop.xlane.xlu0 %1687
        %v1689 = vmul.f32 %v1688, %v1682
        %v1690 = vadd.f32 %v1689, 1e-05
        %v1691 = vrsqrt.pop %v1690
        %v1692 = vmul.f32 %v1684, %v1691
        %v1694 = vlaneseq
        %v1695 = vshrl.u32 %v1694, 7
        %v1696 = vsub.s32 0, %v1695
        %v1697 = vrot.slane %v1677, %v1696
        %v1699 = vmul.f32 %v1692, %v1697
        %v1701 = vlaneseq
        %v1702 = vshrl.u32 %v1701, 7
        %v1703 = vsub.s32 0, %v1702
        %v1704 = vrot.slane %v1678, %v1703
        %v1706 = vadd.f32 %v1699, %v1704
        %v1707 = vpack.c.bf16 %v1706, %v1706
        %v1708 = vld [vmem:[%s811] sm:$0xf]
        %v1709 = vld [vmem:[%s811 + $0x4] sm:$0xf]
        %v1710 = vld [vmem:[%s811 + $0x8] sm:$0xf]
        %v1711 = vld [vmem:[%s811 + $0xc] sm:$0xf]
        %v1712 = vld [vmem:[%s819] sm:$0x1]
        %v1714 = vlaneseq
        %v1715 = vshrl.u32 %v1714, 7
        %v1716 = vsub.s32 0, %v1715
        %v1717 = vrot.slane %v1712, %v1716
        %v1723 = vunpack.c.l.b16 %v1708
        %v1724 = vunpack.c.l.b16 %v1709
        %v1725 = vunpack.c.l.b16 %v1710
        %v1726 = vunpack.c.l.b16 %v1711
        %v1727 = vpack.c.b16 %v1724, %v1723
        %v1728 = vpack.c.b16 %v1726, %v1725
        %v1732 = vsel %vm981, %v1707, 0
        %1734 = vmatprep.subr.bf16.mxu0 0
        %1735 = vmatpush1.bf16.msra.mxu0 %v1727
        %1736 = vmatprep.subr.bf16.mxu0 0
        %1737 = vmatpush1.bf16.msra.mxu0 %v1728
        %1738 = vmatprep.subr.bf16.mxu0 0
        %1739 = vmatpush1.bf16.msra.mxu0 0
        %1740 = vmatprep.subr.bf16.mxu0 0
        %1741 = vmatpush1.bf16.msra.mxu0 0
        %1742 = vmatprep.subr.bf16.mxu0 0
        %1743 = vmatpush1.bf16.msra.mxu0 0
        %1744 = vmatprep.subr.bf16.mxu0 0
        %1745 = vmatpush1.bf16.msra.mxu0 0
        %1746 = vmatprep.subr.bf16.mxu0 0
        %1747 = vmatpush1.bf16.msra.mxu0 0
        %1748 = vmatprep.subr.bf16.mxu0 0
        %1749 = vmatpush1.bf16.msra.mxu0 0
        %1750 = vmatprep.subr.bf16.mxu0 0
        %1751 = vmatpush1.bf16.msra.mxu0 0
        %1752 = vmatprep.subr.bf16.mxu0 0
        %1753 = vmatpush1.bf16.msra.mxu0 0
        %1754 = vmatprep.subr.bf16.mxu0 0
        %1755 = vmatpush1.bf16.msra.mxu0 0
        %1756 = vmatprep.subr.bf16.mxu0 0
        %1757 = vmatpush1.bf16.msra.mxu0 0
        %1758 = vmatprep.subr.bf16.mxu0 0
        %1759 = vmatpush1.bf16.msra.mxu0 0
        %1760 = vmatprep.subr.bf16.mxu0 0
        %1761 = vmatpush1.bf16.msra.mxu0 0
        %1762 = vmatprep.subr.bf16.mxu0 0
        %1763 = vmatpush1.bf16.msra.mxu0 0
        %1764 = vmatprep.subr.bf16.mxu0 0
        %1765 = vmatpush1.bf16.msra.mxu0 0
        %1766 = vmatprep.mubr.bf16.mxu0 0
        %1767 = vmatmul.mubr.bf16.gmra.mrb[0].mxu0 %v1732
        %v1768 = vpop.f32.mrb[0].mxu0
        %v1769 = vadd.f32 %v1717, %v1768
        %v1770 = vpop.f32.mrb[0].mxu0
        %v1771 = vpop.f32.mrb[0].mxu0
        %v1772 = vpop.f32.mrb[0].mxu0
        %1773 = vdwg.mxu0
        %v1774 = vmax.f32 %v1769, 0.0
        %v1775 = vpack.c.bf16 %v1774, %v1774
        %v1776 = vld [vmem:[%s828] sm:$0xf]
        %v1777 = vld [vmem:[%s828 + $0x4] sm:$0xf]
        %v1778 = vld [vmem:[%s828 + $0x8] sm:$0xf]
        %v1779 = vld [vmem:[%s828 + $0xc] sm:$0xf]
        %v1780 = vld [vmem:[%s828 + $0x10] sm:$0xf]
        %v1781 = vld [vmem:[%s828 + $0x14] sm:$0xf]
        %v1782 = vld [vmem:[%s828 + $0x18] sm:$0xf]
        %v1783 = vld [vmem:[%s828 + $0x1c] sm:$0xf]
        %v1784 = vld [vmem:[%s836] sm:$0x1]
        %v1786 = vlaneseq
        %v1787 = vshrl.u32 %v1786, 7
        %v1788 = vsub.s32 0, %v1787
        %v1789 = vrot.slane %v1784, %v1788
        %v1799 = vunpack.c.l.b16 %v1776
        %v1800 = vunpack.c.l.b16 %v1777
        %v1801 = vunpack.c.l.b16 %v1778
        %v1802 = vunpack.c.l.b16 %v1779
        %v1803 = vunpack.c.l.b16 %v1780
        %v1804 = vunpack.c.l.b16 %v1781
        %v1805 = vunpack.c.l.b16 %v1782
        %v1806 = vunpack.c.l.b16 %v1783
        %v1807 = vpack.c.b16 %v1800, %v1799
        %v1808 = vpack.c.b16 %v1802, %v1801
        %v1809 = vpack.c.b16 %v1804, %v1803
        %v1810 = vpack.c.b16 %v1806, %v1805
        %vm1815 = vcmask 523264
        %v1817 = vsel %vm1815, %v1775, 0
        %1819 = vmatprep.subr.bf16.mxu0 0
        %1820 = vmatpush1.bf16.msra.mxu0 %v1807
        %1821 = vmatprep.subr.bf16.mxu0 0
        %1822 = vmatpush1.bf16.msra.mxu0 %v1808
        %1823 = vmatprep.subr.bf16.mxu0 0
        %1824 = vmatpush1.bf16.msra.mxu0 %v1809
        %1825 = vmatprep.subr.bf16.mxu0 0
        %1826 = vmatpush1.bf16.msra.mxu0 %v1810
        %1827 = vmatprep.subr.bf16.mxu0 0
        %1828 = vmatpush1.bf16.msra.mxu0 0
        %1829 = vmatprep.subr.bf16.mxu0 0
        %1830 = vmatpush1.bf16.msra.mxu0 0
        %1831 = vmatprep.subr.bf16.mxu0 0
        %1832 = vmatpush1.bf16.msra.mxu0 0
        %1833 = vmatprep.subr.bf16.mxu0 0
        %1834 = vmatpush1.bf16.msra.mxu0 0
        %1835 = vmatprep.subr.bf16.mxu0 0
        %1836 = vmatpush1.bf16.msra.mxu0 0
        %1837 = vmatprep.subr.bf16.mxu0 0
        %1838 = vmatpush1.bf16.msra.mxu0 0
        %1839 = vmatprep.subr.bf16.mxu0 0
        %1840 = vmatpush1.bf16.msra.mxu0 0
        %1841 = vmatprep.subr.bf16.mxu0 0
        %1842 = vmatpush1.bf16.msra.mxu0 0
        %1843 = vmatprep.subr.bf16.mxu0 0
        %1844 = vmatpush1.bf16.msra.mxu0 0
        %1845 = vmatprep.subr.bf16.mxu0 0
        %1846 = vmatpush1.bf16.msra.mxu0 0
        %1847 = vmatprep.subr.bf16.mxu0 0
        %1848 = vmatpush1.bf16.msra.mxu0 0
        %1849 = vmatprep.subr.bf16.mxu0 0
        %1850 = vmatpush1.bf16.msra.mxu0 0
        %1851 = vmatprep.mubr.bf16.mxu0 0
        %1852 = vmatmul.mubr.bf16.gmra.mrb[0].mxu0 %v1817
        %v1853 = vpop.f32.mrb[0].mxu0
        %v1854 = vadd.f32 %v1789, %v1853
        %v1855 = vpop.f32.mrb[0].mxu0
        %v1856 = vpop.f32.mrb[0].mxu0
        %v1857 = vpop.f32.mrb[0].mxu0
        %1858 = vdwg.mxu0
        %v1859 = vadd.f32 %v1854, %v1706
        %v1860 = vld [vmem:[%s844] sm:$0x1]
        %v1861 = vld [vmem:[%s852] sm:$0x1]
        %v1862 = vsel %vm981, %v1859, 0.0
        %1863 = vadd.xlane.f32.xlu0 %v1862
        %v1864 = vpop.xlane.xlu0 %1863
        %v1865 = vmul.f32 %v1864, %v1682
        %v1866 = vsub.f32 %v1859, %v1865
        %v1867 = vmul.f32 %v1866, %v1866
        %v1868 = vsel %vm981, %v1867, 0.0
        %1869 = vadd.xlane.f32.xlu0 %v1868
        %v1870 = vpop.xlane.xlu0 %1869
        %v1871 = vmul.f32 %v1870, %v1682
        %v1872 = vadd.f32 %v1871, 1e-05
        %v1873 = vrsqrt.pop %v1872
        %v1874 = vmul.f32 %v1866, %v1873
        %v1876 = vlaneseq
        %v1877 = vshrl.u32 %v1876, 7
        %v1878 = vsub.s32 0, %v1877
        %v1879 = vrot.slane %v1860, %v1878
        %v1881 = vmul.f32 %v1874, %v1879
        %v1883 = vlaneseq
        %v1884 = vshrl.u32 %v1883, 7
        %v1885 = vsub.s32 0, %v1884
        %v1886 = vrot.slane %v1861, %v1885
        %v1888 = vadd.f32 %v1881, %v1886
        %1889 = vst.msk [vmem:[%s954] sm:$0xff] %vm981, %v1888
        %s1890 = sand.u32 %s436, 1
        %s1891 = scalar_lea.sflag [#allocation4], %s1890
        %s1892 = sand.u32 %s436, 1
        %s1893 = smul.addr %s1892, 8
        %s1894 = scalar_lea.vmem [#allocation25], %s1893
        // Predicated region
        $region137: #{tpu_custom_call.1} parent=75 // pred_check
          %p1895 = pneg %p446
        $region138: #{tpu_custom_call.1} parent=75 // pred_check_branch
          %1897 = sbr.rel (%p1895) target = $region140
        $region139: #{tpu_custom_call.1} parent=75 // pred_region
          %s1899 = ssub.s32 128, 128
          %1900 = vsyncadd %s1891, %s1899
          %s1901 = smul.addr %s56, 128
          %s1902 = scalar_lea.hbm %s14, %s1901
          %s1904 = sshll.u32 %s1894, 4
          %s1905 = int_to_ptr.vmem [resolvable:$true] %s1904
          %1907 = dma.vmem_to_hbm [thread:$0]  %s1905, 128, %s1902, %s1891
        $region140: #{tpu_custom_call.1} parent=75 // pred_fallthru
          _
      $region76: #{tpu_custom_call.1} parent=5 // pred_fallthru
        _
      %p1908 = scmp.le.s32.totalorder 2, %s47
      // Predicated region
      $region141: #{tpu_custom_call.1} parent=5 // pred_check
        %p1909 = pneg %p1908
      $region142: #{tpu_custom_call.1} parent=5 // pred_check_branch
        %1911 = sbr.rel (%p1909) target = $region144
      $region143: #{tpu_custom_call.1} parent=5 // pred_region
        %s1912 = ssub.s32 %s47, 2
        // Predicated region
        $region145: #{tpu_custom_call.1} parent=143 // pred_check
          %p1913 = pneg %p452
        $region146: #{tpu_custom_call.1} parent=143 // pred_check_branch
          %1915 = sbr.rel (%p1913) target = $region148
        $region147: #{tpu_custom_call.1} parent=143 // pred_region
          %s1916 = sand.u32 %s437, 1
          %s1917 = scalar_lea.sflag [#allocation4], %s1916
          %s1918 = sand.u32 %s437, 1
          %s1919 = smul.addr %s1918, 8
          %s1920 = scalar_lea.vmem [#allocation25], %s1919
          %1921 = dma.done %s1917, 128
        $region148: #{tpu_custom_call.1} parent=143 // pred_fallthru
          _
      $region144: #{tpu_custom_call.1} parent=5 // pred_fallthru
        _
    $region6: #{tpu_custom_call.1} parent=1 // loop_footer
      %s51 = sadd.s32 1, %s47
    $region7: #{tpu_custom_call.1} parent=1 // loop_footer_branch
      %46 = sbr.rel target = $region3
    $region8: #{tpu_custom_call.1} parent=1 // loop_exit
      _
    %1922 = vsyncpa [#allocation3], 1
    %s1923 = scalar_lea.sflag [#allocation3], 1
    %1924 = vsyncpa %s1923, 1
    %1925 = vsyncpa [#allocation6], 1
    %s1926 = scalar_lea.sflag [#allocation6], 1
    %1927 = vsyncpa %s1926, 1
    %1928 = vsyncpa [#allocation9], 1
    %s1929 = scalar_lea.sflag [#allocation9], 1
    %1930 = vsyncpa %s1929, 1
    %1931 = vsyncpa [#allocation12], 1
    %s1932 = scalar_lea.sflag [#allocation12], 1
    %1933 = vsyncpa %s1932, 1
    %1934 = vsyncpa [#allocation15], 1
    %s1935 = scalar_lea.sflag [#allocation15], 1
    %1936 = vsyncpa %s1935, 1
    %1937 = vsyncpa [#allocation18], 1
    %s1938 = scalar_lea.sflag [#allocation18], 1
    %1939 = vsyncpa %s1938, 1
    %1940 = vsyncpa [#allocation21], 1
    %s1941 = scalar_lea.sflag [#allocation21], 1
    %1942 = vsyncpa %s1941, 1
    %1943 = vsyncpa [#allocation24], 1
    %s1944 = scalar_lea.sflag [#allocation24], 1
    %1945 = vsyncpa %s1944, 1
    %1946 = vsyncpa [#allocation4], 1
    %s1947 = scalar_lea.sflag [#allocation4], 1
    %1948 = vsyncpa %s1947, 1

</llo_original>
